<compile_context>
chip_gen: v6e
topology: v6e:2x2x1
jax: 0.10.0
libtpu: 0.0.40
codegen_flags: <defaults>
</compile_context>

<pallas_src>
import math

import jax
import jax.numpy as jnp
from jax.experimental import pallas as pl
from jax.experimental.pallas import tpu as pltpu

LN_EPS = 1e-12          # BertPredictionHeadTransform LayerNorm eps (HF default)
# Pinyin() table sizes (shengmu / yunmu / tone). Config-dependent in the
# original repo; representative defaults used here.
SM_SIZE = 24
YM_SIZE = 34
SD_SIZE = 5

_INV_SQRT2 = 1.0 / math.sqrt(2.0)


def _round_up(x, m):
    return ((x + m - 1) // m) * m


def _gelu_exact(x):
    # Exact (erf) GELU, as in BertPredictionHeadTransform default.
    return 0.5 * x * (1.0 + jax.lax.erf(x * _INV_SQRT2))


def _transform(x_lo, w_ref, b, gamma, beta):
    """BertPredictionHeadTransform: dense -> exact (erf) GELU -> LayerNorm."""
    h = jnp.dot(x_lo, w_ref[...], preferred_element_type=jnp.float32)
    h = h + b
    h = _gelu_exact(h)
    mu = jnp.mean(h, axis=-1, keepdims=True)
    var = jnp.mean((h - mu) * (h - mu), axis=-1, keepdims=True)
    h = (h - mu) * jax.lax.rsqrt(var + LN_EPS)
    return h * gamma + beta


def _multitask_kernel(x_ref, wt1_ref, wt2_ref, tp_ref, wdec_ref, bdec_ref,
                      wph_ref, bph_ref, pred_ref, ph_ref):
    # bf16 operands, f32 accumulation (MXU-native path).
    xb = x_ref[...].astype(wt1_ref.dtype)
    tp = tp_ref[...]                       # (6, H) packed b/gamma/beta (f32)

    # ---- BertLMPredictionHead: transform #1 + vocab decoder ----
    h1 = _transform(xb, wt1_ref, tp[0:1], tp[1:2], tp[2:3])
    pred = jnp.dot(h1.astype(wdec_ref.dtype), wdec_ref[...],
                   preferred_element_type=jnp.float32)
    pred_ref[...] = (pred + bdec_ref[...]).astype(pred_ref.dtype)

    # ---- Phonetic_Classifier: transform #2 + fused sm|ym|sd classifier ----
    h2 = _transform(xb, wt2_ref, tp[3:4], tp[4:5], tp[5:6])
    ph = jnp.dot(h2.astype(wph_ref.dtype), wph_ref[...],
                 preferred_element_type=jnp.float32)
    ph_ref[...] = (ph + bph_ref[...]).astype(ph_ref.dtype)


def prepare_params(params, *, compute_dtype=jnp.bfloat16):
    """One-time packing / zero-padding / bf16 casting of the module params.

    Hoisted out of the per-call path: call once, reuse across forward calls.
    """
    H = params["pred_transform_w"].shape[0]
    V = params["decoder_w"].shape[1]
    sm = params["sm_w"].shape[1]
    ym = params["ym_w"].shape[1]
    sd = params["sd_w"].shape[1]
    C = sm + ym + sd
    Vpad = _round_up(V, 128)
    Cpad = _round_up(C, 128)

    # Pack the six (H,) vectors into one (6, H) block (single DMA / buffer).
    tparams = jnp.stack([
        params["pred_transform_b"], params["pred_ln_gamma"], params["pred_ln_beta"],
        params["phon_transform_b"], params["phon_ln_gamma"], params["phon_ln_beta"],
    ], axis=0).astype(jnp.float32)

    w_dec = jnp.zeros((H, Vpad), compute_dtype).at[:, :V].set(
        params["decoder_w"].astype(compute_dtype))
    b_dec = jnp.zeros((1, Vpad), jnp.float32).at[:, :V].set(
        params["decoder_b"].reshape(1, V).astype(jnp.float32))

    w_ph_full = jnp.concatenate(
        [params["sm_w"], params["ym_w"], params["sd_w"]], axis=1)
    b_ph_full = jnp.concatenate(
        [params["sm_b"], params["ym_b"], params["sd_b"]]).reshape(1, C)
    w_ph = jnp.zeros((H, Cpad), compute_dtype).at[:, :C].set(
        w_ph_full.astype(compute_dtype))
    b_ph = jnp.zeros((1, Cpad), jnp.float32).at[:, :C].set(
        b_ph_full.astype(jnp.float32))

    return dict(
        w_t1=params["pred_transform_w"].astype(compute_dtype),
        w_t2=params["phon_transform_w"].astype(compute_dtype),
        tparams=tparams, w_dec=w_dec, b_dec=b_dec, w_ph=w_ph, b_ph=b_ph,
        H=H, V=V, Vpad=Vpad, sm=sm, ym=ym, sd=sd, C=C, Cpad=Cpad)


def multitask_heads(sequence_output, prep, *, tm=256):
    """sequence_output: [B, S, H] f32 -> (prediction, sm, ym, sd) scores."""
    B, S, H = sequence_output.shape
    assert H == prep["H"]
    rows = B * S

    # MXU-aligned row tile: shrink for tiny inputs, pad rows to a multiple
    # (no divisibility assert; padded rows are sliced off afterwards).
    tm_eff = min(tm, _round_up(rows, 8))
    rows_pad = _round_up(rows, tm_eff)

    x2d = sequence_output.reshape(rows, H).astype(jnp.float32)
    if rows_pad != rows:
        x2d = jnp.pad(x2d, ((0, rows_pad - rows), (0, 0)))

    Vpad, Cpad = prep["Vpad"], prep["Cpad"]
    grid = (rows_pad // tm_eff,)

    # Explicit VMEM budget: single-buffered weights + double-buffered
    # x / output tiles + headroom. Capped at 64 MiB (v7x per-TC VMEM).
    wbytes = jnp.dtype(prep["w_t1"].dtype).itemsize
    weight_bytes = (2 * H * H + H * (Vpad + Cpad)) * wbytes \
        + (6 * H + Vpad + Cpad) * 4
    stream_bytes = 2 * tm_eff * (H + Vpad + Cpad) * 4
    vmem_limit = int(min(max(weight_bytes + stream_bytes + (4 << 20), 32 << 20),
                         64 << 20))

    def call(single_buffer_weights):
        pm = {"pipeline_mode": pl.Buffered(1)} if single_buffer_weights else {}
        const = lambda shape: pl.BlockSpec(shape, lambda i: (0, 0), **pm)
        return pl.pallas_call(
            _multitask_kernel,
            out_shape=(jax.ShapeDtypeStruct((rows_pad, Vpad), jnp.float32),
                       jax.ShapeDtypeStruct((rows_pad, Cpad), jnp.float32)),
            grid_spec=pltpu.PrefetchScalarGridSpec(
                num_scalar_prefetch=0,
                grid=grid,
                in_specs=[
                    pl.BlockSpec((tm_eff, H), lambda i: (i, 0)),  # x row tile
                    const((H, H)),        # transform #1 weight (bf16)
                    const((H, H)),        # transform #2 weight (bf16)
                    const((6, H)),        # packed b/gamma/beta (f32)
                    const((H, Vpad)),     # decoder weight (bf16, padded)
                    const((1, Vpad)),     # decoder bias   (f32, padded)
                    const((H, Cpad)),     # fused sm|ym|sd weight (bf16, padded)
                    const((1, Cpad)),     # fused sm|ym|sd bias   (f32, padded)
                ],
                out_specs=(
                    pl.BlockSpec((tm_eff, Vpad), lambda i: (i, 0)),
                    pl.BlockSpec((tm_eff, Cpad), lambda i: (i, 0)),
                ),
            ),
            compiler_params=pltpu.CompilerParams(
                dimension_semantics=("parallel",),
                vmem_limit_bytes=vmem_limit),
        )(x2d, prep["w_t1"], prep["w_t2"], prep["tparams"],
          prep["w_dec"], prep["b_dec"], prep["w_ph"], prep["b_ph"])

    try:
        # Resident weights never change across grid steps -> single-buffer them.
        pred2d, ph2d = call(single_buffer_weights=True)
    except Exception:
        # Fallback for JAX builds that reject pipeline_mode / Buffered(1).
        pred2d, ph2d = call(single_buffer_weights=False)

    V, sm, ym, sd, C = prep["V"], prep["sm"], prep["ym"], prep["sd"], prep["C"]
    prediction_scores = pred2d[:rows, :V].reshape(B, S, V)
    ph = ph2d[:rows, :C]
    sm_scores = ph[:, :sm].reshape(B, S, sm)
    ym_scores = ph[:, sm:sm + ym].reshape(B, S, ym)
    sd_scores = ph[:, sm + ym:].reshape(B, S, sd)
    return prediction_scores, sm_scores, ym_scores, sd_scores


# ----------------------------------------------------------------------------
# Parameter init + pure-JAX reference (module semantics, f32)
# ----------------------------------------------------------------------------
def init_params(key, hidden_size, vocab_size, sm_size, ym_size, sd_size):
    ks = jax.random.split(key, 8)
    scale = 1.0 / jnp.sqrt(hidden_size)

    def lin(k, n_out):
        kw, kb = jax.random.split(k)
        w = jax.random.normal(kw, (hidden_size, n_out), jnp.float32) * scale
        b = jax.random.normal(kb, (n_out,), jnp.float32) * 0.02
        return w, b

    wt1, bt1 = lin(ks[0], hidden_size)
    wdec, bdec = lin(ks[1], vocab_size)
    wt2, bt2 = lin(ks[2], hidden_size)
    wsm, bsm = lin(ks[3], sm_size)
    wym, bym = lin(ks[4], ym_size)
    wsd, bsd = lin(ks[5], sd_size)
    g1 = 1.0 + 0.1 * jax.random.normal(ks[6], (hidden_size,), jnp.float32)
    g2 = 1.0 + 0.1 * jax.random.normal(ks[7], (hidden_size,), jnp.float32)
    z = jnp.zeros((hidden_size,), jnp.float32)
    return dict(
        pred_transform_w=wt1, pred_transform_b=bt1,
        pred_ln_gamma=g1, pred_ln_beta=0.05 + z,
        decoder_w=wdec, decoder_b=bdec,
        phon_transform_w=wt2, phon_transform_b=bt2,
        phon_ln_gamma=g2, phon_ln_beta=-0.05 + z,
        sm_w=wsm, sm_b=bsm, ym_w=wym, ym_b=bym, sd_w=wsd, sd_b=bsd)


def reference(x, p):
    def transform(x, w, b, g, be):
        h = x @ w + b
        h = jax.nn.gelu(h, approximate=False)
        mu = jnp.mean(h, axis=-1, keepdims=True)
        var = jnp.mean((h - mu) ** 2, axis=-1, keepdims=True)
        h = (h - mu) * jax.lax.rsqrt(var + LN_EPS)
        return h * g + be

    h1 = transform(x, p["pred_transform_w"], p["pred_transform_b"],
                   p["pred_ln_gamma"], p["pred_ln_beta"])
    pred = h1 @ p["decoder_w"] + p["decoder_b"]
    h2 = transform(x, p["phon_transform_w"], p["phon_transform_b"],
                   p["phon_ln_gamma"], p["phon_ln_beta"])
    sm = h2 @ p["sm_w"] + p["sm_b"]
    ym = h2 @ p["ym_w"] + p["ym_b"]
    sd = h2 @ p["sd_w"] + p["sd_b"]
    return pred, sm, ym, sd


if __name__ == "__main__":
    key = jax.random.PRNGKey(0)
    kx, kp = jax.random.split(key)

    B, S, H = 2, 8, 32          # small test shapes (prod would be e.g. H=768)
    VOCAB = 96                  # small stand-in for config.vocab_size

    params = init_params(kp, H, VOCAB, SM_SIZE, YM_SIZE, SD_SIZE)
    x = jax.random.normal(kx, (B, S, H), jnp.float32)

    prep = prepare_params(params)               # one-time pad/pack/cast
    outs = multitask_heads(x, prep, tm=256)
    outs = jax.block_until_ready(outs)

    refs = reference(x, params)
    names = ("prediction", "sm", "ym", "sd")
    shapes = ((B, S, VOCAB), (B, S, SM_SIZE), (B, S, YM_SIZE), (B, S, SD_SIZE))
    for name, o, r, shp in zip(names, outs, refs, shapes):
        assert o.shape == shp, (name, o.shape, shp)
        # bf16 matmul operands with f32 accumulation -> bf16-level tolerance.
        err = float(jnp.max(jnp.abs(o - r)))
        assert jnp.allclose(o, r, atol=5e-2, rtol=5e-2), (name, err)

    print("KERNEL_OK")
</pallas_src>

<mosaic_0001>
module attributes {stable_mosaic.version = 11 : i64} {
  func.func @_multitask_kernel(%arg0: i32, %arg1: memref<16x32xf32, #tpu.memory_space<vmem>>, %arg2: memref<32x32xbf16, #tpu.memory_space<vmem>>, %arg3: memref<32x32xbf16, #tpu.memory_space<vmem>>, %arg4: memref<6x32xf32, #tpu.memory_space<vmem>>, %arg5: memref<32x128xbf16, #tpu.memory_space<vmem>>, %arg6: memref<1x128xf32, #tpu.memory_space<vmem>>, %arg7: memref<32x128xbf16, #tpu.memory_space<vmem>>, %arg8: memref<1x128xf32, #tpu.memory_space<vmem>>, %arg9: memref<16x128xf32, #tpu.memory_space<vmem>>, %arg10: memref<16x128xf32, #tpu.memory_space<vmem>>) attributes {dimension_semantics = [#tpu.dimension_semantics<parallel>], iteration_bounds = array<i64: 1>, scalar_prefetch = 0 : i64, scratch_operands = 0 : i64, tpu.core_type = #tpu.core_type<tc>, window_params = [{transform_indices = @transform_0, window_bounds = array<i64: 16, 32>}, {pipeline_mode = #tpu.pipeline_mode<synchronous>, transform_indices = @transform_1, window_bounds = array<i64: 32, 32>}, {pipeline_mode = #tpu.pipeline_mode<synchronous>, transform_indices = @transform_2, window_bounds = array<i64: 32, 32>}, {pipeline_mode = #tpu.pipeline_mode<synchronous>, transform_indices = @transform_3, window_bounds = array<i64: 6, 32>}, {pipeline_mode = #tpu.pipeline_mode<synchronous>, transform_indices = @transform_4, window_bounds = array<i64: 32, 128>}, {pipeline_mode = #tpu.pipeline_mode<synchronous>, transform_indices = @transform_5, window_bounds = array<i64: 1, 128>}, {pipeline_mode = #tpu.pipeline_mode<synchronous>, transform_indices = @transform_6, window_bounds = array<i64: 32, 128>}, {pipeline_mode = #tpu.pipeline_mode<synchronous>, transform_indices = @transform_7, window_bounds = array<i64: 1, 128>}, {transform_indices = @transform_8, window_bounds = array<i64: 16, 128>}, {transform_indices = @transform_9, window_bounds = array<i64: 16, 128>}]} {
    %c0 = arith.constant 0 : index
    %c0_0 = arith.constant 0 : index
    %0 = vector.load %arg1[%c0, %c0_0] : memref<16x32xf32, #tpu.memory_space<vmem>>, vector<16x32xf32>
    %1 = arith.truncf %0 : vector<16x32xf32> to vector<16x32xbf16>
    %c0_1 = arith.constant 0 : index
    %c0_2 = arith.constant 0 : index
    %2 = vector.load %arg4[%c0_1, %c0_2] : memref<6x32xf32, #tpu.memory_space<vmem>>, vector<6x32xf32>
    %3 = vector.extract_strided_slice %2 {offsets = [0, 0], sizes = [1, 32], strides = [1, 1]} : vector<6x32xf32> to vector<1x32xf32>
    %4 = vector.extract_strided_slice %2 {offsets = [1, 0], sizes = [1, 32], strides = [1, 1]} : vector<6x32xf32> to vector<1x32xf32>
    %5 = vector.extract_strided_slice %2 {offsets = [2, 0], sizes = [1, 32], strides = [1, 1]} : vector<6x32xf32> to vector<1x32xf32>
    %c0_3 = arith.constant 0 : index
    %c0_4 = arith.constant 0 : index
    %6 = vector.load %arg2[%c0_3, %c0_4] : memref<32x32xbf16, #tpu.memory_space<vmem>>, vector<32x32xbf16>
    %cst = arith.constant dense<0.000000e+00> : vector<16x32xf32>
    %7 = tpu.matmul %1, %6, %cst {dimension_numbers = #tpu.dot_dimension_numbers<[1], [0], [0], [1], [0, 0, 1, 1], [], []>} : vector<16x32xbf16>, vector<32x32xbf16>, vector<16x32xf32> -> vector<16x32xf32>
    %8 = vector.broadcast %3 : vector<1x32xf32> to vector<16x32xf32>
    %9 = arith.addf %7, %8 : vector<16x32xf32>
    %cst_5 = arith.constant 5.000000e-01 : f32
    %10 = vector.broadcast %cst_5 : f32 to vector<16x32xf32>
    %11 = arith.mulf %10, %9 : vector<16x32xf32>
    %cst_6 = arith.constant 0.707106769 : f32
    %12 = vector.broadcast %cst_6 : f32 to vector<16x32xf32>
    %13 = arith.mulf %9, %12 : vector<16x32xf32>
    %14 = math.erf %13 : vector<16x32xf32>
    %cst_7 = arith.constant 1.000000e+00 : f32
    %15 = vector.broadcast %cst_7 : f32 to vector<16x32xf32>
    %16 = arith.addf %15, %14 : vector<16x32xf32>
    %17 = arith.mulf %11, %16 : vector<16x32xf32>
    %cst_8 = arith.constant dense<0.000000e+00> : vector<16xf32>
    %18 = vector.multi_reduction <add>, %17, %cst_8 [1] : vector<16x32xf32> to vector<16xf32>
    %19 = vector.shape_cast %18 : vector<16xf32> to vector<16x1xf32>
    %cst_9 = arith.constant 3.200000e+01 : f32
    %20 = vector.broadcast %cst_9 : f32 to vector<16x1xf32>
    %21 = arith.divf %19, %20 : vector<16x1xf32>
    %22 = vector.broadcast %21 : vector<16x1xf32> to vector<16x32xf32>
    %23 = arith.subf %17, %22 : vector<16x32xf32>
    %24 = vector.broadcast %21 : vector<16x1xf32> to vector<16x32xf32>
    %25 = arith.subf %17, %24 : vector<16x32xf32>
    %26 = arith.mulf %23, %25 : vector<16x32xf32>
    %cst_10 = arith.constant dense<0.000000e+00> : vector<16xf32>
    %27 = vector.multi_reduction <add>, %26, %cst_10 [1] : vector<16x32xf32> to vector<16xf32>
    %28 = vector.shape_cast %27 : vector<16xf32> to vector<16x1xf32>
    %cst_11 = arith.constant 3.200000e+01 : f32
    %29 = vector.broadcast %cst_11 : f32 to vector<16x1xf32>
    %30 = arith.divf %28, %29 : vector<16x1xf32>
    %31 = vector.broadcast %21 : vector<16x1xf32> to vector<16x32xf32>
    %32 = arith.subf %17, %31 : vector<16x32xf32>
    %cst_12 = arith.constant 9.99999996E-13 : f32
    %33 = vector.broadcast %cst_12 : f32 to vector<16x1xf32>
    %34 = arith.addf %30, %33 : vector<16x1xf32>
    %35 = math.rsqrt %34 : vector<16x1xf32>
    %36 = vector.broadcast %35 : vector<16x1xf32> to vector<16x32xf32>
    %37 = arith.mulf %32, %36 : vector<16x32xf32>
    %38 = vector.broadcast %4 : vector<1x32xf32> to vector<16x32xf32>
    %39 = arith.mulf %37, %38 : vector<16x32xf32>
    %40 = vector.broadcast %5 : vector<1x32xf32> to vector<16x32xf32>
    %41 = arith.addf %39, %40 : vector<16x32xf32>
    %42 = arith.truncf %41 : vector<16x32xf32> to vector<16x32xbf16>
    %c0_13 = arith.constant 0 : index
    %c0_14 = arith.constant 0 : index
    %43 = vector.load %arg5[%c0_13, %c0_14] : memref<32x128xbf16, #tpu.memory_space<vmem>>, vector<32x128xbf16>
    %cst_15 = arith.constant dense<0.000000e+00> : vector<16x128xf32>
    %44 = tpu.matmul %42, %43, %cst_15 {dimension_numbers = #tpu.dot_dimension_numbers<[1], [0], [0], [1], [0, 0, 1, 1], [], []>} : vector<16x32xbf16>, vector<32x128xbf16>, vector<16x128xf32> -> vector<16x128xf32>
    %c0_16 = arith.constant 0 : index
    %c0_17 = arith.constant 0 : index
    %45 = vector.load %arg6[%c0_16, %c0_17] : memref<1x128xf32, #tpu.memory_space<vmem>>, vector<1x128xf32>
    %46 = vector.broadcast %45 : vector<1x128xf32> to vector<16x128xf32>
    %47 = arith.addf %44, %46 : vector<16x128xf32>
    %c0_18 = arith.constant 0 : index
    %c0_19 = arith.constant 0 : index
    %48 = vector.load %arg9[%c0_18, %c0_19] : memref<16x128xf32, #tpu.memory_space<vmem>>, vector<16x128xf32>
    tpu.vector_store %arg9[%c0_18, %c0_19], %47 {strides = array<i32>} : memref<16x128xf32, #tpu.memory_space<vmem>>, vector<16x128xf32>,
    %49 = vector.extract_strided_slice %2 {offsets = [3, 0], sizes = [1, 32], strides = [1, 1]} : vector<6x32xf32> to vector<1x32xf32>
    %50 = vector.extract_strided_slice %2 {offsets = [4, 0], sizes = [1, 32], strides = [1, 1]} : vector<6x32xf32> to vector<1x32xf32>
    %51 = vector.extract_strided_slice %2 {offsets = [5, 0], sizes = [1, 32], strides = [1, 1]} : vector<6x32xf32> to vector<1x32xf32>
    %c0_20 = arith.constant 0 : index
    %c0_21 = arith.constant 0 : index
    %52 = vector.load %arg3[%c0_20, %c0_21] : memref<32x32xbf16, #tpu.memory_space<vmem>>, vector<32x32xbf16>
    %cst_22 = arith.constant dense<0.000000e+00> : vector<16x32xf32>
    %53 = tpu.matmul %1, %52, %cst_22 {dimension_numbers = #tpu.dot_dimension_numbers<[1], [0], [0], [1], [0, 0, 1, 1], [], []>} : vector<16x32xbf16>, vector<32x32xbf16>, vector<16x32xf32> -> vector<16x32xf32>
    %54 = vector.broadcast %49 : vector<1x32xf32> to vector<16x32xf32>
    %55 = arith.addf %53, %54 : vector<16x32xf32>
    %cst_23 = arith.constant 5.000000e-01 : f32
    %56 = vector.broadcast %cst_23 : f32 to vector<16x32xf32>
    %57 = arith.mulf %56, %55 : vector<16x32xf32>
    %cst_24 = arith.constant 0.707106769 : f32
    %58 = vector.broadcast %cst_24 : f32 to vector<16x32xf32>
    %59 = arith.mulf %55, %58 : vector<16x32xf32>
    %60 = math.erf %59 : vector<16x32xf32>
    %cst_25 = arith.constant 1.000000e+00 : f32
    %61 = vector.broadcast %cst_25 : f32 to vector<16x32xf32>
    %62 = arith.addf %61, %60 : vector<16x32xf32>
    %63 = arith.mulf %57, %62 : vector<16x32xf32>
    %cst_26 = arith.constant dense<0.000000e+00> : vector<16xf32>
    %64 = vector.multi_reduction <add>, %63, %cst_26 [1] : vector<16x32xf32> to vector<16xf32>
    %65 = vector.shape_cast %64 : vector<16xf32> to vector<16x1xf32>
    %cst_27 = arith.constant 3.200000e+01 : f32
    %66 = vector.broadcast %cst_27 : f32 to vector<16x1xf32>
    %67 = arith.divf %65, %66 : vector<16x1xf32>
    %68 = vector.broadcast %67 : vector<16x1xf32> to vector<16x32xf32>
    %69 = arith.subf %63, %68 : vector<16x32xf32>
    %70 = vector.broadcast %67 : vector<16x1xf32> to vector<16x32xf32>
    %71 = arith.subf %63, %70 : vector<16x32xf32>
    %72 = arith.mulf %69, %71 : vector<16x32xf32>
    %cst_28 = arith.constant dense<0.000000e+00> : vector<16xf32>
    %73 = vector.multi_reduction <add>, %72, %cst_28 [1] : vector<16x32xf32> to vector<16xf32>
    %74 = vector.shape_cast %73 : vector<16xf32> to vector<16x1xf32>
    %cst_29 = arith.constant 3.200000e+01 : f32
    %75 = vector.broadcast %cst_29 : f32 to vector<16x1xf32>
    %76 = arith.divf %74, %75 : vector<16x1xf32>
    %77 = vector.broadcast %67 : vector<16x1xf32> to vector<16x32xf32>
    %78 = arith.subf %63, %77 : vector<16x32xf32>
    %cst_30 = arith.constant 9.99999996E-13 : f32
    %79 = vector.broadcast %cst_30 : f32 to vector<16x1xf32>
    %80 = arith.addf %76, %79 : vector<16x1xf32>
    %81 = math.rsqrt %80 : vector<16x1xf32>
    %82 = vector.broadcast %81 : vector<16x1xf32> to vector<16x32xf32>
    %83 = arith.mulf %78, %82 : vector<16x32xf32>
    %84 = vector.broadcast %50 : vector<1x32xf32> to vector<16x32xf32>
    %85 = arith.mulf %83, %84 : vector<16x32xf32>
    %86 = vector.broadcast %51 : vector<1x32xf32> to vector<16x32xf32>
    %87 = arith.addf %85, %86 : vector<16x32xf32>
    %88 = arith.truncf %87 : vector<16x32xf32> to vector<16x32xbf16>
    %c0_31 = arith.constant 0 : index
    %c0_32 = arith.constant 0 : index
    %89 = vector.load %arg7[%c0_31, %c0_32] : memref<32x128xbf16, #tpu.memory_space<vmem>>, vector<32x128xbf16>
    %cst_33 = arith.constant dense<0.000000e+00> : vector<16x128xf32>
    %90 = tpu.matmul %88, %89, %cst_33 {dimension_numbers = #tpu.dot_dimension_numbers<[1], [0], [0], [1], [0, 0, 1, 1], [], []>} : vector<16x32xbf16>, vector<32x128xbf16>, vector<16x128xf32> -> vector<16x128xf32>
    %c0_34 = arith.constant 0 : index
    %c0_35 = arith.constant 0 : index
    %91 = vector.load %arg8[%c0_34, %c0_35] : memref<1x128xf32, #tpu.memory_space<vmem>>, vector<1x128xf32>
    %92 = vector.broadcast %91 : vector<1x128xf32> to vector<16x128xf32>
    %93 = arith.addf %90, %92 : vector<16x128xf32>
    %c0_36 = arith.constant 0 : index
    %c0_37 = arith.constant 0 : index
    %94 = vector.load %arg10[%c0_36, %c0_37] : memref<16x128xf32, #tpu.memory_space<vmem>>, vector<16x128xf32>
    tpu.vector_store %arg10[%c0_36, %c0_37], %93 {strides = array<i32>} : memref<16x128xf32, #tpu.memory_space<vmem>>, vector<16x128xf32>,
    return
  }
  func.func @transform_0(%arg0: i32) -> (i32, i32) {
    %c0_i32 = arith.constant 0 : i32
    %c0_i32_0 = arith.constant 0 : i32
    return %arg0, %c0_i32 : i32, i32
  }
  func.func @transform_1(%arg0: i32) -> (i32, i32) {
    %c0_i32 = arith.constant 0 : i32
    %c0_i32_0 = arith.constant 0 : i32
    %c0_i32_1 = arith.constant 0 : i32
    return %c0_i32, %c0_i32_0 : i32, i32
  }
  func.func @transform_2(%arg0: i32) -> (i32, i32) {
    %c0_i32 = arith.constant 0 : i32
    %c0_i32_0 = arith.constant 0 : i32
    %c0_i32_1 = arith.constant 0 : i32
    return %c0_i32, %c0_i32_0 : i32, i32
  }
  func.func @transform_3(%arg0: i32) -> (i32, i32) {
    %c0_i32 = arith.constant 0 : i32
    %c0_i32_0 = arith.constant 0 : i32
    %c0_i32_1 = arith.constant 0 : i32
    return %c0_i32, %c0_i32_0 : i32, i32
  }
  func.func @transform_4(%arg0: i32) -> (i32, i32) {
    %c0_i32 = arith.constant 0 : i32
    %c0_i32_0 = arith.constant 0 : i32
    %c0_i32_1 = arith.constant 0 : i32
    return %c0_i32, %c0_i32_0 : i32, i32
  }
  func.func @transform_5(%arg0: i32) -> (i32, i32) {
    %c0_i32 = arith.constant 0 : i32
    %c0_i32_0 = arith.constant 0 : i32
    %c0_i32_1 = arith.constant 0 : i32
    return %c0_i32, %c0_i32_0 : i32, i32
  }
  func.func @transform_6(%arg0: i32) -> (i32, i32) {
    %c0_i32 = arith.constant 0 : i32
    %c0_i32_0 = arith.constant 0 : i32
    %c0_i32_1 = arith.constant 0 : i32
    return %c0_i32, %c0_i32_0 : i32, i32
  }
  func.func @transform_7(%arg0: i32) -> (i32, i32) {
    %c0_i32 = arith.constant 0 : i32
    %c0_i32_0 = arith.constant 0 : i32
    %c0_i32_1 = arith.constant 0 : i32
    return %c0_i32, %c0_i32_0 : i32, i32
  }
  func.func @transform_8(%arg0: i32) -> (i32, i32) {
    %c0_i32 = arith.constant 0 : i32
    %c0_i32_0 = arith.constant 0 : i32
    return %arg0, %c0_i32 : i32, i32
  }
  func.func @transform_9(%arg0: i32) -> (i32, i32) {
    %c0_i32 = arith.constant 0 : i32
    %c0_i32_0 = arith.constant 0 : i32
    return %arg0, %c0_i32 : i32, i32
  }
}

module attributes {stable_mosaic.version = 11 : i64} {
  func.func @_multitask_kernel(%arg0: i32, %arg1: memref<16x32xf32, #tpu.memory_space<vmem>>, %arg2: memref<32x32xbf16, #tpu.memory_space<vmem>>, %arg3: memref<32x32xbf16, #tpu.memory_space<vmem>>, %arg4: memref<6x32xf32, #tpu.memory_space<vmem>>, %arg5: memref<32x128xbf16, #tpu.memory_space<vmem>>, %arg6: memref<1x128xf32, #tpu.memory_space<vmem>>, %arg7: memref<32x128xbf16, #tpu.memory_space<vmem>>, %arg8: memref<1x128xf32, #tpu.memory_space<vmem>>, %arg9: memref<16x128xf32, #tpu.memory_space<vmem>>, %arg10: memref<16x128xf32, #tpu.memory_space<vmem>>) attributes {dimension_semantics = [#tpu.dimension_semantics<parallel>], iteration_bounds = array<i64: 1>, scalar_prefetch = 0 : i64, scratch_operands = 0 : i64, tpu.core_type = #tpu.core_type<tc>, window_params = [{transform_indices = @transform_0, window_bounds = array<i64: 16, 32>}, {pipeline_mode = #tpu.pipeline_mode<synchronous>, transform_indices = @transform_1, window_bounds = array<i64: 32, 32>}, {pipeline_mode = #tpu.pipeline_mode<synchronous>, transform_indices = @transform_2, window_bounds = array<i64: 32, 32>}, {pipeline_mode = #tpu.pipeline_mode<synchronous>, transform_indices = @transform_3, window_bounds = array<i64: 6, 32>}, {pipeline_mode = #tpu.pipeline_mode<synchronous>, transform_indices = @transform_4, window_bounds = array<i64: 32, 128>}, {pipeline_mode = #tpu.pipeline_mode<synchronous>, transform_indices = @transform_5, window_bounds = array<i64: 1, 128>}, {pipeline_mode = #tpu.pipeline_mode<synchronous>, transform_indices = @transform_6, window_bounds = array<i64: 32, 128>}, {pipeline_mode = #tpu.pipeline_mode<synchronous>, transform_indices = @transform_7, window_bounds = array<i64: 1, 128>}, {transform_indices = @transform_8, window_bounds = array<i64: 16, 128>}, {transform_indices = @transform_9, window_bounds = array<i64: 16, 128>}]} {
    %c0 = arith.constant 0 : index
    %c0_0 = arith.constant 0 : index
    %0 = vector.load %arg1[%c0, %c0_0] : memref<16x32xf32, #tpu.memory_space<vmem>>, vector<16x32xf32>
    %1 = arith.truncf %0 : vector<16x32xf32> to vector<16x32xbf16>
    %c0_1 = arith.constant 0 : index
    %c0_2 = arith.constant 0 : index
    %2 = vector.load %arg4[%c0_1, %c0_2] : memref<6x32xf32, #tpu.memory_space<vmem>>, vector<6x32xf32>
    %3 = vector.extract_strided_slice %2 {offsets = [0, 0], sizes = [1, 32], strides = [1, 1]} : vector<6x32xf32> to vector<1x32xf32>
    %4 = vector.extract_strided_slice %2 {offsets = [1, 0], sizes = [1, 32], strides = [1, 1]} : vector<6x32xf32> to vector<1x32xf32>
    %5 = vector.extract_strided_slice %2 {offsets = [2, 0], sizes = [1, 32], strides = [1, 1]} : vector<6x32xf32> to vector<1x32xf32>
    %c0_3 = arith.constant 0 : index
    %c0_4 = arith.constant 0 : index
    %6 = vector.load %arg2[%c0_3, %c0_4] : memref<32x32xbf16, #tpu.memory_space<vmem>>, vector<32x32xbf16>
    %cst = arith.constant dense<0.000000e+00> : vector<16x32xf32>
    %7 = tpu.matmul %1, %6, %cst {dimension_numbers = #tpu.dot_dimension_numbers<[1], [0], [0], [1], [0, 0, 1, 1], [], []>} : vector<16x32xbf16>, vector<32x32xbf16>, vector<16x32xf32> -> vector<16x32xf32>
    %8 = vector.broadcast %3 : vector<1x32xf32> to vector<16x32xf32>
    %9 = arith.addf %7, %8 : vector<16x32xf32>
    %cst_5 = arith.constant 5.000000e-01 : f32
    %10 = vector.broadcast %cst_5 : f32 to vector<16x32xf32>
    %11 = arith.mulf %10, %9 : vector<16x32xf32>
    %cst_6 = arith.constant 0.707106769 : f32
    %12 = vector.broadcast %cst_6 : f32 to vector<16x32xf32>
    %13 = arith.mulf %9, %12 : vector<16x32xf32>
    %14 = math.erf %13 : vector<16x32xf32>
    %cst_7 = arith.constant 1.000000e+00 : f32
    %15 = vector.broadcast %cst_7 : f32 to vector<16x32xf32>
    %16 = arith.addf %15, %14 : vector<16x32xf32>
    %17 = arith.mulf %11, %16 : vector<16x32xf32>
    %cst_8 = arith.constant dense<0.000000e+00> : vector<16xf32>
    %18 = vector.multi_reduction <add>, %17, %cst_8 [1] : vector<16x32xf32> to vector<16xf32>
    %19 = vector.shape_cast %18 : vector<16xf32> to vector<16x1xf32>
    %cst_9 = arith.constant 3.200000e+01 : f32
    %20 = vector.broadcast %cst_9 : f32 to vector<16x1xf32>
    %21 = arith.divf %19, %20 : vector<16x1xf32>
    %22 = vector.broadcast %21 : vector<16x1xf32> to vector<16x32xf32>
    %23 = arith.subf %17, %22 : vector<16x32xf32>
    %24 = vector.broadcast %21 : vector<16x1xf32> to vector<16x32xf32>
    %25 = arith.subf %17, %24 : vector<16x32xf32>
    %26 = arith.mulf %23, %25 : vector<16x32xf32>
    %cst_10 = arith.constant dense<0.000000e+00> : vector<16xf32>
    %27 = vector.multi_reduction <add>, %26, %cst_10 [1] : vector<16x32xf32> to vector<16xf32>
    %28 = vector.shape_cast %27 : vector<16xf32> to vector<16x1xf32>
    %cst_11 = arith.constant 3.200000e+01 : f32
    %29 = vector.broadcast %cst_11 : f32 to vector<16x1xf32>
    %30 = arith.divf %28, %29 : vector<16x1xf32>
    %31 = vector.broadcast %21 : vector<16x1xf32> to vector<16x32xf32>
    %32 = arith.subf %17, %31 : vector<16x32xf32>
    %cst_12 = arith.constant 9.99999996E-13 : f32
    %33 = vector.broadcast %cst_12 : f32 to vector<16x1xf32>
    %34 = arith.addf %30, %33 : vector<16x1xf32>
    %35 = math.rsqrt %34 : vector<16x1xf32>
    %36 = vector.broadcast %35 : vector<16x1xf32> to vector<16x32xf32>
    %37 = arith.mulf %32, %36 : vector<16x32xf32>
    %38 = vector.broadcast %4 : vector<1x32xf32> to vector<16x32xf32>
    %39 = arith.mulf %37, %38 : vector<16x32xf32>
    %40 = vector.broadcast %5 : vector<1x32xf32> to vector<16x32xf32>
    %41 = arith.addf %39, %40 : vector<16x32xf32>
    %42 = arith.truncf %41 : vector<16x32xf32> to vector<16x32xbf16>
    %c0_13 = arith.constant 0 : index
    %c0_14 = arith.constant 0 : index
    %43 = vector.load %arg5[%c0_13, %c0_14] : memref<32x128xbf16, #tpu.memory_space<vmem>>, vector<32x128xbf16>
    %cst_15 = arith.constant dense<0.000000e+00> : vector<16x128xf32>
    %44 = tpu.matmul %42, %43, %cst_15 {dimension_numbers = #tpu.dot_dimension_numbers<[1], [0], [0], [1], [0, 0, 1, 1], [], []>} : vector<16x32xbf16>, vector<32x128xbf16>, vector<16x128xf32> -> vector<16x128xf32>
    %c0_16 = arith.constant 0 : index
    %c0_17 = arith.constant 0 : index
    %45 = vector.load %arg6[%c0_16, %c0_17] : memref<1x128xf32, #tpu.memory_space<vmem>>, vector<1x128xf32>
    %46 = vector.broadcast %45 : vector<1x128xf32> to vector<16x128xf32>
    %47 = arith.addf %44, %46 : vector<16x128xf32>
    %c0_18 = arith.constant 0 : index
    %c0_19 = arith.constant 0 : index
    %48 = vector.load %arg9[%c0_18, %c0_19] : memref<16x128xf32, #tpu.memory_space<vmem>>, vector<16x128xf32>
    tpu.vector_store %arg9[%c0_18, %c0_19], %47 {strides = array<i32>} : memref<16x128xf32, #tpu.memory_space<vmem>>, vector<16x128xf32>,
    %49 = vector.extract_strided_slice %2 {offsets = [3, 0], sizes = [1, 32], strides = [1, 1]} : vector<6x32xf32> to vector<1x32xf32>
    %50 = vector.extract_strided_slice %2 {offsets = [4, 0], sizes = [1, 32], strides = [1, 1]} : vector<6x32xf32> to vector<1x32xf32>
    %51 = vector.extract_strided_slice %2 {offsets = [5, 0], sizes = [1, 32], strides = [1, 1]} : vector<6x32xf32> to vector<1x32xf32>
    %c0_20 = arith.constant 0 : index
    %c0_21 = arith.constant 0 : index
    %52 = vector.load %arg3[%c0_20, %c0_21] : memref<32x32xbf16, #tpu.memory_space<vmem>>, vector<32x32xbf16>
    %cst_22 = arith.constant dense<0.000000e+00> : vector<16x32xf32>
    %53 = tpu.matmul %1, %52, %cst_22 {dimension_numbers = #tpu.dot_dimension_numbers<[1], [0], [0], [1], [0, 0, 1, 1], [], []>} : vector<16x32xbf16>, vector<32x32xbf16>, vector<16x32xf32> -> vector<16x32xf32>
    %54 = vector.broadcast %49 : vector<1x32xf32> to vector<16x32xf32>
    %55 = arith.addf %53, %54 : vector<16x32xf32>
    %cst_23 = arith.constant 5.000000e-01 : f32
    %56 = vector.broadcast %cst_23 : f32 to vector<16x32xf32>
    %57 = arith.mulf %56, %55 : vector<16x32xf32>
    %cst_24 = arith.constant 0.707106769 : f32
    %58 = vector.broadcast %cst_24 : f32 to vector<16x32xf32>
    %59 = arith.mulf %55, %58 : vector<16x32xf32>
    %60 = math.erf %59 : vector<16x32xf32>
    %cst_25 = arith.constant 1.000000e+00 : f32
    %61 = vector.broadcast %cst_25 : f32 to vector<16x32xf32>
    %62 = arith.addf %61, %60 : vector<16x32xf32>
    %63 = arith.mulf %57, %62 : vector<16x32xf32>
    %cst_26 = arith.constant dense<0.000000e+00> : vector<16xf32>
    %64 = vector.multi_reduction <add>, %63, %cst_26 [1] : vector<16x32xf32> to vector<16xf32>
    %65 = vector.shape_cast %64 : vector<16xf32> to vector<16x1xf32>
    %cst_27 = arith.constant 3.200000e+01 : f32
    %66 = vector.broadcast %cst_27 : f32 to vector<16x1xf32>
    %67 = arith.divf %65, %66 : vector<16x1xf32>
    %68 = vector.broadcast %67 : vector<16x1xf32> to vector<16x32xf32>
    %69 = arith.subf %63, %68 : vector<16x32xf32>
    %70 = vector.broadcast %67 : vector<16x1xf32> to vector<16x32xf32>
    %71 = arith.subf %63, %70 : vector<16x32xf32>
    %72 = arith.mulf %69, %71 : vector<16x32xf32>
    %cst_28 = arith.constant dense<0.000000e+00> : vector<16xf32>
    %73 = vector.multi_reduction <add>, %72, %cst_28 [1] : vector<16x32xf32> to vector<16xf32>
    %74 = vector.shape_cast %73 : vector<16xf32> to vector<16x1xf32>
    %cst_29 = arith.constant 3.200000e+01 : f32
    %75 = vector.broadcast %cst_29 : f32 to vector<16x1xf32>
    %76 = arith.divf %74, %75 : vector<16x1xf32>
    %77 = vector.broadcast %67 : vector<16x1xf32> to vector<16x32xf32>
    %78 = arith.subf %63, %77 : vector<16x32xf32>
    %cst_30 = arith.constant 9.99999996E-13 : f32
    %79 = vector.broadcast %cst_30 : f32 to vector<16x1xf32>
    %80 = arith.addf %76, %79 : vector<16x1xf32>
    %81 = math.rsqrt %80 : vector<16x1xf32>
    %82 = vector.broadcast %81 : vector<16x1xf32> to vector<16x32xf32>
    %83 = arith.mulf %78, %82 : vector<16x32xf32>
    %84 = vector.broadcast %50 : vector<1x32xf32> to vector<16x32xf32>
    %85 = arith.mulf %83, %84 : vector<16x32xf32>
    %86 = vector.broadcast %51 : vector<1x32xf32> to vector<16x32xf32>
    %87 = arith.addf %85, %86 : vector<16x32xf32>
    %88 = arith.truncf %87 : vector<16x32xf32> to vector<16x32xbf16>
    %c0_31 = arith.constant 0 : index
    %c0_32 = arith.constant 0 : index
    %89 = vector.load %arg7[%c0_31, %c0_32] : memref<32x128xbf16, #tpu.memory_space<vmem>>, vector<32x128xbf16>
    %cst_33 = arith.constant dense<0.000000e+00> : vector<16x128xf32>
    %90 = tpu.matmul %88, %89, %cst_33 {dimension_numbers = #tpu.dot_dimension_numbers<[1], [0], [0], [1], [0, 0, 1, 1], [], []>} : vector<16x32xbf16>, vector<32x128xbf16>, vector<16x128xf32> -> vector<16x128xf32>
    %c0_34 = arith.constant 0 : index
    %c0_35 = arith.constant 0 : index
    %91 = vector.load %arg8[%c0_34, %c0_35] : memref<1x128xf32, #tpu.memory_space<vmem>>, vector<1x128xf32>
    %92 = vector.broadcast %91 : vector<1x128xf32> to vector<16x128xf32>
    %93 = arith.addf %90, %92 : vector<16x128xf32>
    %c0_36 = arith.constant 0 : index
    %c0_37 = arith.constant 0 : index
    %94 = vector.load %arg10[%c0_36, %c0_37] : memref<16x128xf32, #tpu.memory_space<vmem>>, vector<16x128xf32>
    tpu.vector_store %arg10[%c0_36, %c0_37], %93 {strides = array<i32>} : memref<16x128xf32, #tpu.memory_space<vmem>>, vector<16x128xf32>,
    return
  }
  func.func @transform_0(%arg0: i32) -> (i32, i32) {
    %c0_i32 = arith.constant 0 : i32
    %c0_i32_0 = arith.constant 0 : i32
    return %arg0, %c0_i32 : i32, i32
  }
  func.func @transform_1(%arg0: i32) -> (i32, i32) {
    %c0_i32 = arith.constant 0 : i32
    %c0_i32_0 = arith.constant 0 : i32
    %c0_i32_1 = arith.constant 0 : i32
    return %c0_i32, %c0_i32_0 : i32, i32
  }
  func.func @transform_2(%arg0: i32) -> (i32, i32) {
    %c0_i32 = arith.constant 0 : i32
    %c0_i32_0 = arith.constant 0 : i32
    %c0_i32_1 = arith.constant 0 : i32
    return %c0_i32, %c0_i32_0 : i32, i32
  }
  func.func @transform_3(%arg0: i32) -> (i32, i32) {
    %c0_i32 = arith.constant 0 : i32
    %c0_i32_0 = arith.constant 0 : i32
    %c0_i32_1 = arith.constant 0 : i32
    return %c0_i32, %c0_i32_0 : i32, i32
  }
  func.func @transform_4(%arg0: i32) -> (i32, i32) {
    %c0_i32 = arith.constant 0 : i32
    %c0_i32_0 = arith.constant 0 : i32
    %c0_i32_1 = arith.constant 0 : i32
    return %c0_i32, %c0_i32_0 : i32, i32
  }
  func.func @transform_5(%arg0: i32) -> (i32, i32) {
    %c0_i32 = arith.constant 0 : i32
    %c0_i32_0 = arith.constant 0 : i32
    %c0_i32_1 = arith.constant 0 : i32
    return %c0_i32, %c0_i32_0 : i32, i32
  }
  func.func @transform_6(%arg0: i32) -> (i32, i32) {
    %c0_i32 = arith.constant 0 : i32
    %c0_i32_0 = arith.constant 0 : i32
    %c0_i32_1 = arith.constant 0 : i32
    return %c0_i32, %c0_i32_0 : i32, i32
  }
  func.func @transform_7(%arg0: i32) -> (i32, i32) {
    %c0_i32 = arith.constant 0 : i32
    %c0_i32_0 = arith.constant 0 : i32
    %c0_i32_1 = arith.constant 0 : i32
    return %c0_i32, %c0_i32_0 : i32, i32
  }
  func.func @transform_8(%arg0: i32) -> (i32, i32) {
    %c0_i32 = arith.constant 0 : i32
    %c0_i32_0 = arith.constant 0 : i32
    return %arg0, %c0_i32 : i32, i32
  }
  func.func @transform_9(%arg0: i32) -> (i32, i32) {
    %c0_i32 = arith.constant 0 : i32
    %c0_i32_0 = arith.constant 0 : i32
    return %arg0, %c0_i32 : i32, i32
  }
}

</mosaic_0001>

<llo_original>
// kernel: tpu_custom_call.1
$region0: #{tpu_custom_call.1}
  #allocation0 [shape = 'u32[]', space=smem, size = 0x4, offset = 0x4, fixed_abs, tag = 'smem constant byte address 0x4 - core index']
  #allocation1 [shape = 'u32[144,128]{1,0:T(1,128)}', space=vmem, size = 0x12000, scoped, tag = 'internal scratch']
  %s0 = inlined_call_operand.hbm [shape: f32[16,32], index: 0, kind: input, shape index: {}]
  %s1 = inlined_call_operand.hbm [shape: bf16[32,32], index: 1, kind: input, shape index: {}]
  %s2 = inlined_call_operand.hbm [shape: bf16[32,32], index: 2, kind: input, shape index: {}]
  %s3 = inlined_call_operand.hbm [shape: f32[6,32], index: 3, kind: input, shape index: {}]
  %s4 = inlined_call_operand.hbm [shape: bf16[32,128], index: 4, kind: input, shape index: {}]
  %s5 = inlined_call_operand.vmem [shape: f32[1,128], index: 5, kind: input, shape index: {}]
  %s6 = inlined_call_operand.hbm [shape: bf16[32,128], index: 6, kind: input, shape index: {}]
  %s7 = inlined_call_operand.vmem [shape: f32[1,128], index: 7, kind: input, shape index: {}]
  %s8 = inlined_call_operand.hbm [shape: f32[16,128], index: 8, kind: output, shape index: {0}]
  %s9 = inlined_call_operand.hbm [shape: f32[16,128], index: 9, kind: output, shape index: {1}]
  %10 = xla_tuple %s8, %s9
  %s11 = sld [smem:[#allocation0]]
  $region74: #{tpu_custom_call.1} parent=0
    _
  %s13 = ssub.s32 1, %s11
  %s14 = scalar_select 0, %s13, %s11
  $region1: #{tpu_custom_call.1} parent=0
    #allocation2 [shape = 'u8[8192]{0}', space=vmem, size = 0x2000, scoped, tag = 'input window, operand 0, single buffered']
    #allocation3 [shape = 's32[1]{0}', space=sflag, size = 0x4, scoped, tag = 'scoped memory for tpu_custom_call.1']
    #allocation4 [shape = 's32[1]{0}', space=sflag, size = 0x4, scoped, tag = 'scoped memory for tpu_custom_call.1']
    #allocation5 [shape = 'u8[8192]{0}', space=vmem, size = 0x2000, scoped, tag = 'input window, operand 1, single buffered']
    #allocation6 [shape = 's32[1]{0}', space=sflag, size = 0x4, scoped, tag = 'scoped memory for tpu_custom_call.1']
    #allocation7 [shape = 'u8[8192]{0}', space=vmem, size = 0x2000, scoped, tag = 'input window, operand 2, single buffered']
    #allocation8 [shape = 'u8[4096]{0}', space=vmem, size = 0x1000, scoped, tag = 'input window, operand 3, single buffered']
    #allocation9 [shape = 's32[1]{0}', space=sflag, size = 0x4, scoped, tag = 'scoped memory for tpu_custom_call.1']
    #allocation10 [shape = 'u8[8192]{0}', space=vmem, size = 0x2000, scoped, tag = 'input window, operand 4, single buffered']
    #allocation11 [shape = 'u8[8192]{0}', space=vmem, size = 0x2000, scoped, tag = 'input window, operand 6, single buffered']
    #allocation12 [shape = 's32[1]{0}', space=sflag, size = 0x4, scoped, tag = 'scoped memory for tpu_custom_call.1']
    #allocation13 [shape = 'u8[8192]{0}', space=vmem, size = 0x2000, scoped, tag = 'output window, operand 0, single buffered']
    #allocation14 [shape = 'u8[8192]{0}', space=vmem, size = 0x2000, scoped, tag = 'output window, operand 1, single buffered']
    #allocation15 [shape = 's32[1]{0}', space=sflag, size = 0x4, scoped, tag = 'scoped memory for tpu_custom_call.1']
    %15 = vsyncpa [#allocation3], 0
    %16 = vsyncpa [#allocation6], 0
    %17 = vsyncpa [#allocation9], 0
    %18 = vsyncpa [#allocation12], 0
    %19 = vsyncpa [#allocation4], 0
    %20 = vsyncpa [#allocation15], 0
    // Predicated region
    $region2: #{tpu_custom_call.1} parent=1 // pred_check
      _
    $region3: #{tpu_custom_call.1} parent=1 // pred_check_branch
      %22 = sbr.rel (0) target = $region5
    $region4: #{tpu_custom_call.1} parent=1 // pred_region
      %s24 = ssub.s32 256, 256
      %25 = vsyncadd [#allocation3], %s24
      %s26 = sshll.u32 [#allocation2], 4
      %s27 = int_to_ptr.vmem [resolvable:$true] %s26
      %32 = dma.hbm_to_vmem [thread:$0]  %s0, 256, %s27, [#allocation3], 128, 128, 8
    $region5: #{tpu_custom_call.1} parent=1 // pred_fallthru
      _
    // Predicated region
    $region6: #{tpu_custom_call.1} parent=1 // pred_check
      _
    $region7: #{tpu_custom_call.1} parent=1 // pred_check_branch
      %34 = sbr.rel (0) target = $region9
    $region8: #{tpu_custom_call.1} parent=1 // pred_region
      %s36 = ssub.s32 256, 256
      %37 = vsyncadd [#allocation6], %s36
      %s38 = sshll.u32 [#allocation5], 4
      %s39 = int_to_ptr.vmem [resolvable:$true] %s38
      %44 = dma.hbm_to_vmem [thread:$0]  %s1, 256, %s39, [#allocation6], 64, 64, 4
    $region9: #{tpu_custom_call.1} parent=1 // pred_fallthru
      _
    // Predicated region
    $region10: #{tpu_custom_call.1} parent=1 // pred_check
      _
    $region11: #{tpu_custom_call.1} parent=1 // pred_check_branch
      %46 = sbr.rel (0) target = $region13
    $region12: #{tpu_custom_call.1} parent=1 // pred_region
      %s48 = ssub.s32 256, 256
      %49 = vsyncadd [#allocation6], %s48
      %s50 = sshll.u32 [#allocation7], 4
      %s51 = int_to_ptr.vmem [resolvable:$true] %s50
      %56 = dma.hbm_to_vmem [thread:$0]  %s2, 256, %s51, [#allocation6], 64, 64, 4
    $region13: #{tpu_custom_call.1} parent=1 // pred_fallthru
      _
    // Predicated region
    $region14: #{tpu_custom_call.1} parent=1 // pred_check
      _
    $region15: #{tpu_custom_call.1} parent=1 // pred_check_branch
      %58 = sbr.rel (0) target = $region17
    $region16: #{tpu_custom_call.1} parent=1 // pred_region
      %s60 = ssub.s32 128, 128
      %61 = vsyncadd [#allocation9], %s60
      %s63 = sshll.u32 [#allocation8], 4
      %s64 = int_to_ptr.vmem [resolvable:$true] %s63
      %66 = dma.hbm_to_vmem [thread:$0]  %s3, 128, %s64, [#allocation9]
    $region17: #{tpu_custom_call.1} parent=1 // pred_fallthru
      _
    // Predicated region
    $region18: #{tpu_custom_call.1} parent=1 // pred_check
      _
    $region19: #{tpu_custom_call.1} parent=1 // pred_check_branch
      %68 = sbr.rel (0) target = $region21
    $region20: #{tpu_custom_call.1} parent=1 // pred_region
      %s70 = ssub.s32 256, 256
      %71 = vsyncadd [#allocation9], %s70
      %s72 = sshll.u32 [#allocation10], 4
      %s73 = int_to_ptr.vmem [resolvable:$true] %s72
      %78 = dma.hbm_to_vmem [thread:$0]  %s4, 256, %s73, [#allocation9], 64, 64, 4
    $region21: #{tpu_custom_call.1} parent=1 // pred_fallthru
      _
    // Predicated region
    $region22: #{tpu_custom_call.1} parent=1 // pred_check
      _
    $region23: #{tpu_custom_call.1} parent=1 // pred_check_branch
      %80 = sbr.rel (0) target = $region25
    $region24: #{tpu_custom_call.1} parent=1 // pred_region
      _
    $region25: #{tpu_custom_call.1} parent=1 // pred_fallthru
      _
    // Predicated region
    $region26: #{tpu_custom_call.1} parent=1 // pred_check
      _
    $region27: #{tpu_custom_call.1} parent=1 // pred_check_branch
      %82 = sbr.rel (0) target = $region29
    $region28: #{tpu_custom_call.1} parent=1 // pred_region
      %s84 = ssub.s32 256, 256
      %85 = vsyncadd [#allocation12], %s84
      %s86 = sshll.u32 [#allocation11], 4
      %s87 = int_to_ptr.vmem [resolvable:$true] %s86
      %92 = dma.hbm_to_vmem [thread:$0]  %s6, 256, %s87, [#allocation12], 64, 64, 4
    $region29: #{tpu_custom_call.1} parent=1 // pred_fallthru
      _
    // Predicated region
    $region30: #{tpu_custom_call.1} parent=1 // pred_check
      _
    $region31: #{tpu_custom_call.1} parent=1 // pred_check_branch
      %94 = sbr.rel (0) target = $region33
    $region32: #{tpu_custom_call.1} parent=1 // pred_region
      _
    $region33: #{tpu_custom_call.1} parent=1 // pred_fallthru
      _
    // Predicated region
    $region34: #{tpu_custom_call.1} parent=1 // pred_check
      _
    $region35: #{tpu_custom_call.1} parent=1 // pred_check_branch
      %96 = sbr.rel (0) target = $region37
    $region36: #{tpu_custom_call.1} parent=1 // pred_region
      %97 = dma.done [#allocation3], 256
    $region37: #{tpu_custom_call.1} parent=1 // pred_fallthru
      _
    // Predicated region
    $region38: #{tpu_custom_call.1} parent=1 // pred_check
      _
    $region39: #{tpu_custom_call.1} parent=1 // pred_check_branch
      %99 = sbr.rel (0) target = $region41
    $region40: #{tpu_custom_call.1} parent=1 // pred_region
      %100 = dma.done [#allocation6], 256
    $region41: #{tpu_custom_call.1} parent=1 // pred_fallthru
      _
    // Predicated region
    $region42: #{tpu_custom_call.1} parent=1 // pred_check
      _
    $region43: #{tpu_custom_call.1} parent=1 // pred_check_branch
      %102 = sbr.rel (0) target = $region45
    $region44: #{tpu_custom_call.1} parent=1 // pred_region
      %103 = dma.done [#allocation6], 256
    $region45: #{tpu_custom_call.1} parent=1 // pred_fallthru
      _
    // Predicated region
    $region46: #{tpu_custom_call.1} parent=1 // pred_check
      _
    $region47: #{tpu_custom_call.1} parent=1 // pred_check_branch
      %105 = sbr.rel (0) target = $region49
    $region48: #{tpu_custom_call.1} parent=1 // pred_region
      %106 = dma.done [#allocation9], 128
    $region49: #{tpu_custom_call.1} parent=1 // pred_fallthru
      _
    // Predicated region
    $region50: #{tpu_custom_call.1} parent=1 // pred_check
      _
    $region51: #{tpu_custom_call.1} parent=1 // pred_check_branch
      %108 = sbr.rel (0) target = $region53
    $region52: #{tpu_custom_call.1} parent=1 // pred_region
      %109 = dma.done [#allocation9], 256
    $region53: #{tpu_custom_call.1} parent=1 // pred_fallthru
      _
    // Predicated region
    $region54: #{tpu_custom_call.1} parent=1 // pred_check
      _
    $region55: #{tpu_custom_call.1} parent=1 // pred_check_branch
      %111 = sbr.rel (0) target = $region57
    $region56: #{tpu_custom_call.1} parent=1 // pred_region
      %112 = dma.done [#allocation12], 256
    $region57: #{tpu_custom_call.1} parent=1 // pred_fallthru
      _
    %v114 = vld [vmem:[#allocation2] sm:$0xff]
    %v115 = vld [vmem:[#allocation2 + $0x8] sm:$0xff]
    %v116 = vpack.c.bf16 %v115, %v114
    %v117 = vld [vmem:[#allocation8] sm:$0x3f]
    %v118 = vld [vmem:[#allocation5] sm:$0xf]
    %v119 = vld [vmem:[#allocation5 + $0x4] sm:$0xf]
    %v120 = vld [vmem:[#allocation5 + $0x8] sm:$0xf]
    %v121 = vld [vmem:[#allocation5 + $0xc] sm:$0xf]
    %v122 = vlaneseq
    %v123 = vshrl.u32 %v122, 7
    %v124 = vsub.s32 0, %v123
    %v125 = vrot.slane %v117, %v124
    %v130 = vunpack.c.l.b16 %v118
    %v131 = vunpack.c.l.b16 %v119
    %v132 = vunpack.c.l.b16 %v120
    %v133 = vunpack.c.l.b16 %v121
    %v134 = vpack.c.b16 %v131, %v130
    %v135 = vpack.c.b16 %v133, %v132
    %vm138 = vcmask 261120
    %v140 = vsel %vm138, %v116, 0
    %142 = vmatprep.subr.bf16.mxu0 0
    %143 = vmatpush1.bf16.msra.mxu0 0
    %144 = vmatprep.subr.bf16.mxu0 0
    %145 = vmatpush1.bf16.msra.mxu0 0
    %146 = vmatprep.subr.bf16.mxu0 0
    %147 = vmatpush1.bf16.msra.mxu0 0
    %148 = vmatprep.subr.bf16.mxu0 0
    %149 = vmatpush1.bf16.msra.mxu0 0
    %150 = vmatprep.subr.bf16.mxu0 0
    %151 = vmatpush1.bf16.msra.mxu0 0
    %152 = vmatprep.subr.bf16.mxu0 0
    %153 = vmatpush1.bf16.msra.mxu0 0
    %154 = vmatprep.subr.bf16.mxu0 0
    %155 = vmatpush1.bf16.msra.mxu0 %v135
    %156 = vmatprep.subr.bf16.mxu0 0
    %157 = vmatpush1.bf16.msra.mxu0 %v134
    %158 = vmatprep.subr.bf16.mxu0 0
    %159 = vmatpush2.bf16.msra.mxu0 0
    %160 = vmatprep.subr.bf16.mxu0 0
    %161 = vmatpush2.bf16.msra.mxu0 0
    %162 = vmatprep.subr.bf16.mxu0 0
    %163 = vmatpush2.bf16.msra.mxu0 0
    %164 = vmatprep.subr.bf16.mxu0 0
    %165 = vmatpush2.bf16.msra.mxu0 0
    %166 = vmatprep.subr.bf16.mxu0 0
    %167 = vmatpush2.bf16.msra.mxu0 0
    %168 = vmatprep.subr.bf16.mxu0 0
    %169 = vmatpush2.bf16.msra.mxu0 0
    %170 = vmatprep.subr.bf16.mxu0 0
    %171 = vmatpush2.bf16.msra.mxu0 0
    %172 = vmatprep.subr.bf16.mxu0 0
    %173 = vmatpush2.bf16.msra.mxu0 0
    %174 = vmatprep.mubr.bf16.mxu0 0
    %175 = vmatmul.mubr.bf16.gmra.mxu0 %v140
    %v176 = vpop.f32.mrf.mxu0
    %v177 = vadd.f32 %v125, %v176
    %v178 = vpop.f32.mrf.mxu0
    %v179 = vpop.f32.mrf.mxu0
    %v180 = vadd.f32 %v125, %v179
    %v181 = vpop.f32.mrf.mxu0
    %182 = vdwg.mxu0
    %v183 = vmul.f32 %v177, 0.5
    %v184 = vmul.f32 %v180, 0.5
    %v185 = vmul.f32 %v177, 0.70710677
    %v186 = vmul.f32 %v180, 0.70710677
    %v187 = verf.f32.pop %v185
    %v188 = verf.f32.pop %v186
    %v189 = vadd.f32 %v187, 1.0
    %v190 = vadd.f32 %v188, 1.0
    %v191 = vmul.f32 %v183, %v189
    %v192 = vmul.f32 %v184, %v190
    %v193 = vsel %vm138, %v191, 0.0
    %194 = vadd.xlane.f32.xlu0 %v193
    %v195 = vpop.xlane.xlu0 %194
    %v196 = vsel %vm138, %v192, 0.0
    %197 = vadd.xlane.f32.xlu0 %v196
    %v198 = vpop.xlane.xlu0 %197
    %v199 = vrcp.pop 32.0
    %v200 = vmul.f32 %v195, %v199
    %v201 = vmul.f32 %v198, %v199
    %v202 = vsub.f32 %v191, %v200
    %v203 = vsub.f32 %v192, %v201
    %v204 = vmul.f32 %v202, %v202
    %v205 = vmul.f32 %v203, %v203
    %v206 = vsel %vm138, %v204, 0.0
    %207 = vadd.xlane.f32.xlu0 %v206
    %v208 = vpop.xlane.xlu0 %207
    %v209 = vsel %vm138, %v205, 0.0
    %210 = vadd.xlane.f32.xlu0 %v209
    %v211 = vpop.xlane.xlu0 %210
    %v212 = vmul.f32 %v208, %v199
    %v213 = vmul.f32 %v211, %v199
    %v214 = vadd.f32 %v212, 1e-12
    %v215 = vadd.f32 %v213, 1e-12
    %v216 = vrsqrt.pop %v214
    %v217 = vrsqrt.pop %v215
    %v218 = vmul.f32 %v202, %v216
    %v219 = vmul.f32 %v203, %v217
    %v220 = vlaneseq
    %v221 = vshrl.u32 %v220, 7
    %v222 = vsub.s32 1, %v221
    %v223 = vrot.slane %v117, %v222
    %v224 = vmul.f32 %v218, %v223
    %v225 = vmul.f32 %v219, %v223
    %v226 = vlaneseq
    %v227 = vshrl.u32 %v226, 7
    %v228 = vsub.s32 2, %v227
    %v229 = vrot.slane %v117, %v228
    %v230 = vadd.f32 %v224, %v229
    %v231 = vadd.f32 %v225, %v229
    %v232 = vpack.c.bf16 %v231, %v230
    %v233 = vld [vmem:[#allocation10] sm:$0xf]
    %v234 = vld [vmem:[#allocation10 + $0x4] sm:$0xf]
    %v235 = vld [vmem:[#allocation10 + $0x8] sm:$0xf]
    %v236 = vld [vmem:[#allocation10 + $0xc] sm:$0xf]
    %v237 = vld [vmem:[%s5] sm:$0x1]
    %v239 = vlaneseq
    %v240 = vshrl.u32 %v239, 7
    %v241 = vsub.s32 0, %v240
    %v242 = vrot.slane %v237, %v241
    %v248 = vunpack.c.l.b16 %v233
    %v249 = vunpack.c.l.b16 %v234
    %v250 = vunpack.c.l.b16 %v235
    %v251 = vunpack.c.l.b16 %v236
    %v252 = vpack.c.b16 %v249, %v248
    %v253 = vpack.c.b16 %v251, %v250
    %v257 = vsel %vm138, %v232, 0
    %259 = vmatprep.subr.bf16.mxu0 0
    %260 = vmatpush1.bf16.msra.mxu0 0
    %261 = vmatprep.subr.bf16.mxu0 0
    %262 = vmatpush1.bf16.msra.mxu0 0
    %263 = vmatprep.subr.bf16.mxu0 0
    %264 = vmatpush1.bf16.msra.mxu0 0
    %265 = vmatprep.subr.bf16.mxu0 0
    %266 = vmatpush1.bf16.msra.mxu0 0
    %267 = vmatprep.subr.bf16.mxu0 0
    %268 = vmatpush1.bf16.msra.mxu0 0
    %269 = vmatprep.subr.bf16.mxu0 0
    %270 = vmatpush1.bf16.msra.mxu0 0
    %271 = vmatprep.subr.bf16.mxu0 0
    %272 = vmatpush1.bf16.msra.mxu0 %v253
    %273 = vmatprep.subr.bf16.mxu0 0
    %274 = vmatpush1.bf16.msra.mxu0 %v252
    %275 = vmatprep.subr.bf16.mxu0 0
    %276 = vmatpush2.bf16.msra.mxu0 0
    %277 = vmatprep.subr.bf16.mxu0 0
    %278 = vmatpush2.bf16.msra.mxu0 0
    %279 = vmatprep.subr.bf16.mxu0 0
    %280 = vmatpush2.bf16.msra.mxu0 0
    %281 = vmatprep.subr.bf16.mxu0 0
    %282 = vmatpush2.bf16.msra.mxu0 0
    %283 = vmatprep.subr.bf16.mxu0 0
    %284 = vmatpush2.bf16.msra.mxu0 0
    %285 = vmatprep.subr.bf16.mxu0 0
    %286 = vmatpush2.bf16.msra.mxu0 0
    %287 = vmatprep.subr.bf16.mxu0 0
    %288 = vmatpush2.bf16.msra.mxu0 0
    %289 = vmatprep.subr.bf16.mxu0 0
    %290 = vmatpush2.bf16.msra.mxu0 0
    %291 = vmatprep.mubr.bf16.mxu0 0
    %292 = vmatmul.mubr.bf16.gmra.mxu0 %v257
    %v293 = vpop.f32.mrf.mxu0
    %v294 = vadd.f32 %v242, %v293
    %v295 = vpop.f32.mrf.mxu0
    %v296 = vpop.f32.mrf.mxu0
    %v297 = vadd.f32 %v242, %v296
    %v298 = vpop.f32.mrf.mxu0
    %299 = vdwg.mxu0
    %300 = vst [vmem:[#allocation13] sm:$0xff] %v294
    %301 = vst [vmem:[#allocation13 + $0x8] sm:$0xff] %v297
    %v302 = vld [vmem:[#allocation7] sm:$0xf]
    %v303 = vld [vmem:[#allocation7 + $0x4] sm:$0xf]
    %v304 = vld [vmem:[#allocation7 + $0x8] sm:$0xf]
    %v305 = vld [vmem:[#allocation7 + $0xc] sm:$0xf]
    %v306 = vlaneseq
    %v307 = vshrl.u32 %v306, 7
    %v308 = vsub.s32 3, %v307
    %v309 = vrot.slane %v117, %v308
    %v314 = vunpack.c.l.b16 %v302
    %v315 = vunpack.c.l.b16 %v303
    %v316 = vunpack.c.l.b16 %v304
    %v317 = vunpack.c.l.b16 %v305
    %v318 = vpack.c.b16 %v315, %v314
    %v319 = vpack.c.b16 %v317, %v316
    %322 = vmatprep.subr.bf16.mxu0 0
    %323 = vmatpush1.bf16.msra.mxu0 0
    %324 = vmatprep.subr.bf16.mxu0 0
    %325 = vmatpush1.bf16.msra.mxu0 0
    %326 = vmatprep.subr.bf16.mxu0 0
    %327 = vmatpush1.bf16.msra.mxu0 0
    %328 = vmatprep.subr.bf16.mxu0 0
    %329 = vmatpush1.bf16.msra.mxu0 0
    %330 = vmatprep.subr.bf16.mxu0 0
    %331 = vmatpush1.bf16.msra.mxu0 0
    %332 = vmatprep.subr.bf16.mxu0 0
    %333 = vmatpush1.bf16.msra.mxu0 0
    %334 = vmatprep.subr.bf16.mxu0 0
    %335 = vmatpush1.bf16.msra.mxu0 %v319
    %336 = vmatprep.subr.bf16.mxu0 0
    %337 = vmatpush1.bf16.msra.mxu0 %v318
    %338 = vmatprep.subr.bf16.mxu0 0
    %339 = vmatpush2.bf16.msra.mxu0 0
    %340 = vmatprep.subr.bf16.mxu0 0
    %341 = vmatpush2.bf16.msra.mxu0 0
    %342 = vmatprep.subr.bf16.mxu0 0
    %343 = vmatpush2.bf16.msra.mxu0 0
    %344 = vmatprep.subr.bf16.mxu0 0
    %345 = vmatpush2.bf16.msra.mxu0 0
    %346 = vmatprep.subr.bf16.mxu0 0
    %347 = vmatpush2.bf16.msra.mxu0 0
    %348 = vmatprep.subr.bf16.mxu0 0
    %349 = vmatpush2.bf16.msra.mxu0 0
    %350 = vmatprep.subr.bf16.mxu0 0
    %351 = vmatpush2.bf16.msra.mxu0 0
    %352 = vmatprep.subr.bf16.mxu0 0
    %353 = vmatpush2.bf16.msra.mxu0 0
    %354 = vmatprep.mubr.bf16.mxu0 0
    %355 = vmatmul.mubr.bf16.gmra.mxu0 %v140
    %v356 = vpop.f32.mrf.mxu0
    %v357 = vadd.f32 %v309, %v356
    %v358 = vpop.f32.mrf.mxu0
    %v359 = vpop.f32.mrf.mxu0
    %v360 = vadd.f32 %v309, %v359
    %v361 = vpop.f32.mrf.mxu0
    %362 = vdwg.mxu0
    %v363 = vmul.f32 %v357, 0.5
    %v364 = vmul.f32 %v360, 0.5
    %v365 = vmul.f32 %v357, 0.70710677
    %v366 = vmul.f32 %v360, 0.70710677
    %v367 = verf.f32.pop %v365
    %v368 = verf.f32.pop %v366
    %v369 = vadd.f32 %v367, 1.0
    %v370 = vadd.f32 %v368, 1.0
    %v371 = vmul.f32 %v363, %v369
    %v372 = vmul.f32 %v364, %v370
    %v373 = vsel %vm138, %v371, 0.0
    %374 = vadd.xlane.f32.xlu0 %v373
    %v375 = vpop.xlane.xlu0 %374
    %v376 = vsel %vm138, %v372, 0.0
    %377 = vadd.xlane.f32.xlu0 %v376
    %v378 = vpop.xlane.xlu0 %377
    %v379 = vmul.f32 %v375, %v199
    %v380 = vmul.f32 %v378, %v199
    %v381 = vsub.f32 %v371, %v379
    %v382 = vsub.f32 %v372, %v380
    %v383 = vmul.f32 %v381, %v381
    %v384 = vmul.f32 %v382, %v382
    %v385 = vsel %vm138, %v383, 0.0
    %386 = vadd.xlane.f32.xlu0 %v385
    %v387 = vpop.xlane.xlu0 %386
    %v388 = vsel %vm138, %v384, 0.0
    %389 = vadd.xlane.f32.xlu0 %v388
    %v390 = vpop.xlane.xlu0 %389
    %v391 = vmul.f32 %v387, %v199
    %v392 = vmul.f32 %v390, %v199
    %v393 = vadd.f32 %v391, 1e-12
    %v394 = vadd.f32 %v392, 1e-12
    %v395 = vrsqrt.pop %v393
    %v396 = vrsqrt.pop %v394
    %v397 = vmul.f32 %v381, %v395
    %v398 = vmul.f32 %v382, %v396
    %v399 = vlaneseq
    %v400 = vshrl.u32 %v399, 7
    %v401 = vsub.s32 4, %v400
    %v402 = vrot.slane %v117, %v401
    %v403 = vmul.f32 %v397, %v402
    %v404 = vmul.f32 %v398, %v402
    %v405 = vlaneseq
    %v406 = vshrl.u32 %v405, 7
    %v407 = vsub.s32 5, %v406
    %v408 = vrot.slane %v117, %v407
    %v409 = vadd.f32 %v403, %v408
    %v410 = vadd.f32 %v404, %v408
    %v411 = vpack.c.bf16 %v410, %v409
    %v412 = vld [vmem:[#allocation11] sm:$0xf]
    %v413 = vld [vmem:[#allocation11 + $0x4] sm:$0xf]
    %v414 = vld [vmem:[#allocation11 + $0x8] sm:$0xf]
    %v415 = vld [vmem:[#allocation11 + $0xc] sm:$0xf]
    %v416 = vld [vmem:[%s7] sm:$0x1]
    %v418 = vlaneseq
    %v419 = vshrl.u32 %v418, 7
    %v420 = vsub.s32 0, %v419
    %v421 = vrot.slane %v416, %v420
    %v427 = vunpack.c.l.b16 %v412
    %v428 = vunpack.c.l.b16 %v413
    %v429 = vunpack.c.l.b16 %v414
    %v430 = vunpack.c.l.b16 %v415
    %v431 = vpack.c.b16 %v428, %v427
    %v432 = vpack.c.b16 %v430, %v429
    %v436 = vsel %vm138, %v411, 0
    %438 = vmatprep.subr.bf16.mxu0 0
    %439 = vmatpush1.bf16.msra.mxu0 0
    %440 = vmatprep.subr.bf16.mxu0 0
    %441 = vmatpush1.bf16.msra.mxu0 0
    %442 = vmatprep.subr.bf16.mxu0 0
    %443 = vmatpush1.bf16.msra.mxu0 0
    %444 = vmatprep.subr.bf16.mxu0 0
    %445 = vmatpush1.bf16.msra.mxu0 0
    %446 = vmatprep.subr.bf16.mxu0 0
    %447 = vmatpush1.bf16.msra.mxu0 0
    %448 = vmatprep.subr.bf16.mxu0 0
    %449 = vmatpush1.bf16.msra.mxu0 0
    %450 = vmatprep.subr.bf16.mxu0 0
    %451 = vmatpush1.bf16.msra.mxu0 %v432
    %452 = vmatprep.subr.bf16.mxu0 0
    %453 = vmatpush1.bf16.msra.mxu0 %v431
    %454 = vmatprep.subr.bf16.mxu0 0
    %455 = vmatpush2.bf16.msra.mxu0 0
    %456 = vmatprep.subr.bf16.mxu0 0
    %457 = vmatpush2.bf16.msra.mxu0 0
    %458 = vmatprep.subr.bf16.mxu0 0
    %459 = vmatpush2.bf16.msra.mxu0 0
    %460 = vmatprep.subr.bf16.mxu0 0
    %461 = vmatpush2.bf16.msra.mxu0 0
    %462 = vmatprep.subr.bf16.mxu0 0
    %463 = vmatpush2.bf16.msra.mxu0 0
    %464 = vmatprep.subr.bf16.mxu0 0
    %465 = vmatpush2.bf16.msra.mxu0 0
    %466 = vmatprep.subr.bf16.mxu0 0
    %467 = vmatpush2.bf16.msra.mxu0 0
    %468 = vmatprep.subr.bf16.mxu0 0
    %469 = vmatpush2.bf16.msra.mxu0 0
    %470 = vmatprep.mubr.bf16.mxu0 0
    %471 = vmatmul.mubr.bf16.gmra.mxu0 %v436
    %v472 = vpop.f32.mrf.mxu0
    %v473 = vadd.f32 %v421, %v472
    %v474 = vpop.f32.mrf.mxu0
    %v475 = vpop.f32.mrf.mxu0
    %v476 = vadd.f32 %v421, %v475
    %v477 = vpop.f32.mrf.mxu0
    %478 = vdwg.mxu0
    %479 = vst [vmem:[#allocation14] sm:$0xff] %v473
    %480 = vst [vmem:[#allocation14 + $0x8] sm:$0xff] %v476
    // Predicated region
    $region58: #{tpu_custom_call.1} parent=1 // pred_check
      _
    $region59: #{tpu_custom_call.1} parent=1 // pred_check_branch
      %482 = sbr.rel (0) target = $region61
    $region60: #{tpu_custom_call.1} parent=1 // pred_region
      %s484 = ssub.s32 256, 256
      %485 = vsyncadd [#allocation4], %s484
      %s486 = sshll.u32 [#allocation13], 4
      %s487 = int_to_ptr.vmem [resolvable:$true] %s486
      %492 = dma.vmem_to_hbm [thread:$0]  %s487, 256, %s8, [#allocation4], 128, 128, 8
    $region61: #{tpu_custom_call.1} parent=1 // pred_fallthru
      _
    // Predicated region
    $region62: #{tpu_custom_call.1} parent=1 // pred_check
      _
    $region63: #{tpu_custom_call.1} parent=1 // pred_check_branch
      %494 = sbr.rel (0) target = $region65
    $region64: #{tpu_custom_call.1} parent=1 // pred_region
      %s496 = ssub.s32 256, 256
      %497 = vsyncadd [#allocation15], %s496
      %s498 = sshll.u32 [#allocation14], 4
      %s499 = int_to_ptr.vmem [resolvable:$true] %s498
      %504 = dma.vmem_to_hbm [thread:$0]  %s499, 256, %s9, [#allocation15], 128, 128, 8
    $region65: #{tpu_custom_call.1} parent=1 // pred_fallthru
      _
    // Predicated region
    $region66: #{tpu_custom_call.1} parent=1 // pred_check
      _
    $region67: #{tpu_custom_call.1} parent=1 // pred_check_branch
      %506 = sbr.rel (0) target = $region69
    $region68: #{tpu_custom_call.1} parent=1 // pred_region
      %507 = dma.done [#allocation4], 256
    $region69: #{tpu_custom_call.1} parent=1 // pred_fallthru
      _
    // Predicated region
    $region70: #{tpu_custom_call.1} parent=1 // pred_check
      _
    $region71: #{tpu_custom_call.1} parent=1 // pred_check_branch
      %509 = sbr.rel (0) target = $region73
    $region72: #{tpu_custom_call.1} parent=1 // pred_region
      %510 = dma.done [#allocation15], 256
    $region73: #{tpu_custom_call.1} parent=1 // pred_fallthru
      _
    %511 = vsyncpa [#allocation3], 1
    %512 = vsyncpa [#allocation6], 1
    %513 = vsyncpa [#allocation9], 1
    %514 = vsyncpa [#allocation12], 1
    %515 = vsyncpa [#allocation4], 1
    %516 = vsyncpa [#allocation15], 1

// kernel: tpu_custom_call.1
$region0: #{tpu_custom_call.1}
  #allocation0 [shape = 'u32[]', space=smem, size = 0x4, offset = 0x4, fixed_abs, tag = 'smem constant byte address 0x4 - core index']
  #allocation1 [shape = 'u32[144,128]{1,0:T(1,128)}', space=vmem, size = 0x12000, scoped, tag = 'internal scratch']
  %s0 = inlined_call_operand.hbm [shape: f32[16,32], index: 0, kind: input, shape index: {}]
  %s1 = inlined_call_operand.hbm [shape: bf16[32,32], index: 1, kind: input, shape index: {}]
  %s2 = inlined_call_operand.hbm [shape: bf16[32,32], index: 2, kind: input, shape index: {}]
  %s3 = inlined_call_operand.hbm [shape: f32[6,32], index: 3, kind: input, shape index: {}]
  %s4 = inlined_call_operand.hbm [shape: bf16[32,128], index: 4, kind: input, shape index: {}]
  %s5 = inlined_call_operand.vmem [shape: f32[1,128], index: 5, kind: input, shape index: {}]
  %s6 = inlined_call_operand.hbm [shape: bf16[32,128], index: 6, kind: input, shape index: {}]
  %s7 = inlined_call_operand.vmem [shape: f32[1,128], index: 7, kind: input, shape index: {}]
  %s8 = inlined_call_operand.hbm [shape: f32[16,128], index: 8, kind: output, shape index: {0}]
  %s9 = inlined_call_operand.hbm [shape: f32[16,128], index: 9, kind: output, shape index: {1}]
  %10 = xla_tuple %s8, %s9
  %s11 = sld [smem:[#allocation0]]
  $region74: #{tpu_custom_call.1} parent=0
    _
  %s13 = ssub.s32 1, %s11
  %s14 = scalar_select 0, %s13, %s11
  $region1: #{tpu_custom_call.1} parent=0
    #allocation2 [shape = 'u8[8192]{0}', space=vmem, size = 0x2000, scoped, tag = 'input window, operand 0, single buffered']
    #allocation3 [shape = 's32[1]{0}', space=sflag, size = 0x4, scoped, tag = 'scoped memory for tpu_custom_call.1']
    #allocation4 [shape = 's32[1]{0}', space=sflag, size = 0x4, scoped, tag = 'scoped memory for tpu_custom_call.1']
    #allocation5 [shape = 'u8[8192]{0}', space=vmem, size = 0x2000, scoped, tag = 'input window, operand 1, single buffered']
    #allocation6 [shape = 's32[1]{0}', space=sflag, size = 0x4, scoped, tag = 'scoped memory for tpu_custom_call.1']
    #allocation7 [shape = 'u8[8192]{0}', space=vmem, size = 0x2000, scoped, tag = 'input window, operand 2, single buffered']
    #allocation8 [shape = 'u8[4096]{0}', space=vmem, size = 0x1000, scoped, tag = 'input window, operand 3, single buffered']
    #allocation9 [shape = 's32[1]{0}', space=sflag, size = 0x4, scoped, tag = 'scoped memory for tpu_custom_call.1']
    #allocation10 [shape = 'u8[8192]{0}', space=vmem, size = 0x2000, scoped, tag = 'input window, operand 4, single buffered']
    #allocation11 [shape = 'u8[8192]{0}', space=vmem, size = 0x2000, scoped, tag = 'input window, operand 6, single buffered']
    #allocation12 [shape = 's32[1]{0}', space=sflag, size = 0x4, scoped, tag = 'scoped memory for tpu_custom_call.1']
    #allocation13 [shape = 'u8[8192]{0}', space=vmem, size = 0x2000, scoped, tag = 'output window, operand 0, single buffered']
    #allocation14 [shape = 'u8[8192]{0}', space=vmem, size = 0x2000, scoped, tag = 'output window, operand 1, single buffered']
    #allocation15 [shape = 's32[1]{0}', space=sflag, size = 0x4, scoped, tag = 'scoped memory for tpu_custom_call.1']
    %15 = vsyncpa [#allocation3], 0
    %16 = vsyncpa [#allocation6], 0
    %17 = vsyncpa [#allocation9], 0
    %18 = vsyncpa [#allocation12], 0
    %19 = vsyncpa [#allocation4], 0
    %20 = vsyncpa [#allocation15], 0
    // Predicated region
    $region2: #{tpu_custom_call.1} parent=1 // pred_check
      _
    $region3: #{tpu_custom_call.1} parent=1 // pred_check_branch
      %22 = sbr.rel (0) target = $region5
    $region4: #{tpu_custom_call.1} parent=1 // pred_region
      %s24 = ssub.s32 256, 256
      %25 = vsyncadd [#allocation3], %s24
      %s26 = sshll.u32 [#allocation2], 4
      %s27 = int_to_ptr.vmem [resolvable:$true] %s26
      %32 = dma.hbm_to_vmem [thread:$0]  %s0, 256, %s27, [#allocation3], 128, 128, 8
    $region5: #{tpu_custom_call.1} parent=1 // pred_fallthru
      _
    // Predicated region
    $region6: #{tpu_custom_call.1} parent=1 // pred_check
      _
    $region7: #{tpu_custom_call.1} parent=1 // pred_check_branch
      %34 = sbr.rel (0) target = $region9
    $region8: #{tpu_custom_call.1} parent=1 // pred_region
      %s36 = ssub.s32 256, 256
      %37 = vsyncadd [#allocation6], %s36
      %s38 = sshll.u32 [#allocation5], 4
      %s39 = int_to_ptr.vmem [resolvable:$true] %s38
      %44 = dma.hbm_to_vmem [thread:$0]  %s1, 256, %s39, [#allocation6], 64, 64, 4
    $region9: #{tpu_custom_call.1} parent=1 // pred_fallthru
      _
    // Predicated region
    $region10: #{tpu_custom_call.1} parent=1 // pred_check
      _
    $region11: #{tpu_custom_call.1} parent=1 // pred_check_branch
      %46 = sbr.rel (0) target = $region13
    $region12: #{tpu_custom_call.1} parent=1 // pred_region
      %s48 = ssub.s32 256, 256
      %49 = vsyncadd [#allocation6], %s48
      %s50 = sshll.u32 [#allocation7], 4
      %s51 = int_to_ptr.vmem [resolvable:$true] %s50
      %56 = dma.hbm_to_vmem [thread:$0]  %s2, 256, %s51, [#allocation6], 64, 64, 4
    $region13: #{tpu_custom_call.1} parent=1 // pred_fallthru
      _
    // Predicated region
    $region14: #{tpu_custom_call.1} parent=1 // pred_check
      _
    $region15: #{tpu_custom_call.1} parent=1 // pred_check_branch
      %58 = sbr.rel (0) target = $region17
    $region16: #{tpu_custom_call.1} parent=1 // pred_region
      %s60 = ssub.s32 128, 128
      %61 = vsyncadd [#allocation9], %s60
      %s63 = sshll.u32 [#allocation8], 4
      %s64 = int_to_ptr.vmem [resolvable:$true] %s63
      %66 = dma.hbm_to_vmem [thread:$0]  %s3, 128, %s64, [#allocation9]
    $region17: #{tpu_custom_call.1} parent=1 // pred_fallthru
      _
    // Predicated region
    $region18: #{tpu_custom_call.1} parent=1 // pred_check
      _
    $region19: #{tpu_custom_call.1} parent=1 // pred_check_branch
      %68 = sbr.rel (0) target = $region21
    $region20: #{tpu_custom_call.1} parent=1 // pred_region
      %s70 = ssub.s32 256, 256
      %71 = vsyncadd [#allocation9], %s70
      %s72 = sshll.u32 [#allocation10], 4
      %s73 = int_to_ptr.vmem [resolvable:$true] %s72
      %78 = dma.hbm_to_vmem [thread:$0]  %s4, 256, %s73, [#allocation9], 64, 64, 4
    $region21: #{tpu_custom_call.1} parent=1 // pred_fallthru
      _
    // Predicated region
    $region22: #{tpu_custom_call.1} parent=1 // pred_check
      _
    $region23: #{tpu_custom_call.1} parent=1 // pred_check_branch
      %80 = sbr.rel (0) target = $region25
    $region24: #{tpu_custom_call.1} parent=1 // pred_region
      _
    $region25: #{tpu_custom_call.1} parent=1 // pred_fallthru
      _
    // Predicated region
    $region26: #{tpu_custom_call.1} parent=1 // pred_check
      _
    $region27: #{tpu_custom_call.1} parent=1 // pred_check_branch
      %82 = sbr.rel (0) target = $region29
    $region28: #{tpu_custom_call.1} parent=1 // pred_region
      %s84 = ssub.s32 256, 256
      %85 = vsyncadd [#allocation12], %s84
      %s86 = sshll.u32 [#allocation11], 4
      %s87 = int_to_ptr.vmem [resolvable:$true] %s86
      %92 = dma.hbm_to_vmem [thread:$0]  %s6, 256, %s87, [#allocation12], 64, 64, 4
    $region29: #{tpu_custom_call.1} parent=1 // pred_fallthru
      _
    // Predicated region
    $region30: #{tpu_custom_call.1} parent=1 // pred_check
      _
    $region31: #{tpu_custom_call.1} parent=1 // pred_check_branch
      %94 = sbr.rel (0) target = $region33
    $region32: #{tpu_custom_call.1} parent=1 // pred_region
      _
    $region33: #{tpu_custom_call.1} parent=1 // pred_fallthru
      _
    // Predicated region
    $region34: #{tpu_custom_call.1} parent=1 // pred_check
      _
    $region35: #{tpu_custom_call.1} parent=1 // pred_check_branch
      %96 = sbr.rel (0) target = $region37
    $region36: #{tpu_custom_call.1} parent=1 // pred_region
      %97 = dma.done [#allocation3], 256
    $region37: #{tpu_custom_call.1} parent=1 // pred_fallthru
      _
    // Predicated region
    $region38: #{tpu_custom_call.1} parent=1 // pred_check
      _
    $region39: #{tpu_custom_call.1} parent=1 // pred_check_branch
      %99 = sbr.rel (0) target = $region41
    $region40: #{tpu_custom_call.1} parent=1 // pred_region
      %100 = dma.done [#allocation6], 256
    $region41: #{tpu_custom_call.1} parent=1 // pred_fallthru
      _
    // Predicated region
    $region42: #{tpu_custom_call.1} parent=1 // pred_check
      _
    $region43: #{tpu_custom_call.1} parent=1 // pred_check_branch
      %102 = sbr.rel (0) target = $region45
    $region44: #{tpu_custom_call.1} parent=1 // pred_region
      %103 = dma.done [#allocation6], 256
    $region45: #{tpu_custom_call.1} parent=1 // pred_fallthru
      _
    // Predicated region
    $region46: #{tpu_custom_call.1} parent=1 // pred_check
      _
    $region47: #{tpu_custom_call.1} parent=1 // pred_check_branch
      %105 = sbr.rel (0) target = $region49
    $region48: #{tpu_custom_call.1} parent=1 // pred_region
      %106 = dma.done [#allocation9], 128
    $region49: #{tpu_custom_call.1} parent=1 // pred_fallthru
      _
    // Predicated region
    $region50: #{tpu_custom_call.1} parent=1 // pred_check
      _
    $region51: #{tpu_custom_call.1} parent=1 // pred_check_branch
      %108 = sbr.rel (0) target = $region53
    $region52: #{tpu_custom_call.1} parent=1 // pred_region
      %109 = dma.done [#allocation9], 256
    $region53: #{tpu_custom_call.1} parent=1 // pred_fallthru
      _
    // Predicated region
    $region54: #{tpu_custom_call.1} parent=1 // pred_check
      _
    $region55: #{tpu_custom_call.1} parent=1 // pred_check_branch
      %111 = sbr.rel (0) target = $region57
    $region56: #{tpu_custom_call.1} parent=1 // pred_region
      %112 = dma.done [#allocation12], 256
    $region57: #{tpu_custom_call.1} parent=1 // pred_fallthru
      _
    %v114 = vld [vmem:[#allocation2] sm:$0xff]
    %v115 = vld [vmem:[#allocation2 + $0x8] sm:$0xff]
    %v116 = vpack.c.bf16 %v115, %v114
    %v117 = vld [vmem:[#allocation8] sm:$0x3f]
    %v118 = vld [vmem:[#allocation5] sm:$0xf]
    %v119 = vld [vmem:[#allocation5 + $0x4] sm:$0xf]
    %v120 = vld [vmem:[#allocation5 + $0x8] sm:$0xf]
    %v121 = vld [vmem:[#allocation5 + $0xc] sm:$0xf]
    %v122 = vlaneseq
    %v123 = vshrl.u32 %v122, 7
    %v124 = vsub.s32 0, %v123
    %v125 = vrot.slane %v117, %v124
    %v130 = vunpack.c.l.b16 %v118
    %v131 = vunpack.c.l.b16 %v119
    %v132 = vunpack.c.l.b16 %v120
    %v133 = vunpack.c.l.b16 %v121
    %v134 = vpack.c.b16 %v131, %v130
    %v135 = vpack.c.b16 %v133, %v132
    %vm138 = vcmask 261120
    %v140 = vsel %vm138, %v116, 0
    %142 = vmatprep.subr.bf16.mxu0 0
    %143 = vmatpush1.bf16.msra.mxu0 0
    %144 = vmatprep.subr.bf16.mxu0 0
    %145 = vmatpush1.bf16.msra.mxu0 0
    %146 = vmatprep.subr.bf16.mxu0 0
    %147 = vmatpush1.bf16.msra.mxu0 0
    %148 = vmatprep.subr.bf16.mxu0 0
    %149 = vmatpush1.bf16.msra.mxu0 0
    %150 = vmatprep.subr.bf16.mxu0 0
    %151 = vmatpush1.bf16.msra.mxu0 0
    %152 = vmatprep.subr.bf16.mxu0 0
    %153 = vmatpush1.bf16.msra.mxu0 0
    %154 = vmatprep.subr.bf16.mxu0 0
    %155 = vmatpush1.bf16.msra.mxu0 %v135
    %156 = vmatprep.subr.bf16.mxu0 0
    %157 = vmatpush1.bf16.msra.mxu0 %v134
    %158 = vmatprep.subr.bf16.mxu0 0
    %159 = vmatpush2.bf16.msra.mxu0 0
    %160 = vmatprep.subr.bf16.mxu0 0
    %161 = vmatpush2.bf16.msra.mxu0 0
    %162 = vmatprep.subr.bf16.mxu0 0
    %163 = vmatpush2.bf16.msra.mxu0 0
    %164 = vmatprep.subr.bf16.mxu0 0
    %165 = vmatpush2.bf16.msra.mxu0 0
    %166 = vmatprep.subr.bf16.mxu0 0
    %167 = vmatpush2.bf16.msra.mxu0 0
    %168 = vmatprep.subr.bf16.mxu0 0
    %169 = vmatpush2.bf16.msra.mxu0 0
    %170 = vmatprep.subr.bf16.mxu0 0
    %171 = vmatpush2.bf16.msra.mxu0 0
    %172 = vmatprep.subr.bf16.mxu0 0
    %173 = vmatpush2.bf16.msra.mxu0 0
    %174 = vmatprep.mubr.bf16.mxu0 0
    %175 = vmatmul.mubr.bf16.gmra.mxu0 %v140
    %v176 = vpop.f32.mrf.mxu0
    %v177 = vadd.f32 %v125, %v176
    %v178 = vpop.f32.mrf.mxu0
    %v179 = vpop.f32.mrf.mxu0
    %v180 = vadd.f32 %v125, %v179
    %v181 = vpop.f32.mrf.mxu0
    %182 = vdwg.mxu0
    %v183 = vmul.f32 %v177, 0.5
    %v184 = vmul.f32 %v180, 0.5
    %v185 = vmul.f32 %v177, 0.70710677
    %v186 = vmul.f32 %v180, 0.70710677
    %v187 = verf.f32.pop %v185
    %v188 = verf.f32.pop %v186
    %v189 = vadd.f32 %v187, 1.0
    %v190 = vadd.f32 %v188, 1.0
    %v191 = vmul.f32 %v183, %v189
    %v192 = vmul.f32 %v184, %v190
    %v193 = vsel %vm138, %v191, 0.0
    %194 = vadd.xlane.f32.xlu0 %v193
    %v195 = vpop.xlane.xlu0 %194
    %v196 = vsel %vm138, %v192, 0.0
    %197 = vadd.xlane.f32.xlu0 %v196
    %v198 = vpop.xlane.xlu0 %197
    %v199 = vrcp.pop 32.0
    %v200 = vmul.f32 %v195, %v199
    %v201 = vmul.f32 %v198, %v199
    %v202 = vsub.f32 %v191, %v200
    %v203 = vsub.f32 %v192, %v201
    %v204 = vmul.f32 %v202, %v202
    %v205 = vmul.f32 %v203, %v203
    %v206 = vsel %vm138, %v204, 0.0
    %207 = vadd.xlane.f32.xlu0 %v206
    %v208 = vpop.xlane.xlu0 %207
    %v209 = vsel %vm138, %v205, 0.0
    %210 = vadd.xlane.f32.xlu0 %v209
    %v211 = vpop.xlane.xlu0 %210
    %v212 = vmul.f32 %v208, %v199
    %v213 = vmul.f32 %v211, %v199
    %v214 = vadd.f32 %v212, 1e-12
    %v215 = vadd.f32 %v213, 1e-12
    %v216 = vrsqrt.pop %v214
    %v217 = vrsqrt.pop %v215
    %v218 = vmul.f32 %v202, %v216
    %v219 = vmul.f32 %v203, %v217
    %v220 = vlaneseq
    %v221 = vshrl.u32 %v220, 7
    %v222 = vsub.s32 1, %v221
    %v223 = vrot.slane %v117, %v222
    %v224 = vmul.f32 %v218, %v223
    %v225 = vmul.f32 %v219, %v223
    %v226 = vlaneseq
    %v227 = vshrl.u32 %v226, 7
    %v228 = vsub.s32 2, %v227
    %v229 = vrot.slane %v117, %v228
    %v230 = vadd.f32 %v224, %v229
    %v231 = vadd.f32 %v225, %v229
    %v232 = vpack.c.bf16 %v231, %v230
    %v233 = vld [vmem:[#allocation10] sm:$0xf]
    %v234 = vld [vmem:[#allocation10 + $0x4] sm:$0xf]
    %v235 = vld [vmem:[#allocation10 + $0x8] sm:$0xf]
    %v236 = vld [vmem:[#allocation10 + $0xc] sm:$0xf]
    %v237 = vld [vmem:[%s5] sm:$0x1]
    %v239 = vlaneseq
    %v240 = vshrl.u32 %v239, 7
    %v241 = vsub.s32 0, %v240
    %v242 = vrot.slane %v237, %v241
    %v248 = vunpack.c.l.b16 %v233
    %v249 = vunpack.c.l.b16 %v234
    %v250 = vunpack.c.l.b16 %v235
    %v251 = vunpack.c.l.b16 %v236
    %v252 = vpack.c.b16 %v249, %v248
    %v253 = vpack.c.b16 %v251, %v250
    %v257 = vsel %vm138, %v232, 0
    %259 = vmatprep.subr.bf16.mxu0 0
    %260 = vmatpush1.bf16.msra.mxu0 0
    %261 = vmatprep.subr.bf16.mxu0 0
    %262 = vmatpush1.bf16.msra.mxu0 0
    %263 = vmatprep.subr.bf16.mxu0 0
    %264 = vmatpush1.bf16.msra.mxu0 0
    %265 = vmatprep.subr.bf16.mxu0 0
    %266 = vmatpush1.bf16.msra.mxu0 0
    %267 = vmatprep.subr.bf16.mxu0 0
    %268 = vmatpush1.bf16.msra.mxu0 0
    %269 = vmatprep.subr.bf16.mxu0 0
    %270 = vmatpush1.bf16.msra.mxu0 0
    %271 = vmatprep.subr.bf16.mxu0 0
    %272 = vmatpush1.bf16.msra.mxu0 %v253
    %273 = vmatprep.subr.bf16.mxu0 0
    %274 = vmatpush1.bf16.msra.mxu0 %v252
    %275 = vmatprep.subr.bf16.mxu0 0
    %276 = vmatpush2.bf16.msra.mxu0 0
    %277 = vmatprep.subr.bf16.mxu0 0
    %278 = vmatpush2.bf16.msra.mxu0 0
    %279 = vmatprep.subr.bf16.mxu0 0
    %280 = vmatpush2.bf16.msra.mxu0 0
    %281 = vmatprep.subr.bf16.mxu0 0
    %282 = vmatpush2.bf16.msra.mxu0 0
    %283 = vmatprep.subr.bf16.mxu0 0
    %284 = vmatpush2.bf16.msra.mxu0 0
    %285 = vmatprep.subr.bf16.mxu0 0
    %286 = vmatpush2.bf16.msra.mxu0 0
    %287 = vmatprep.subr.bf16.mxu0 0
    %288 = vmatpush2.bf16.msra.mxu0 0
    %289 = vmatprep.subr.bf16.mxu0 0
    %290 = vmatpush2.bf16.msra.mxu0 0
    %291 = vmatprep.mubr.bf16.mxu0 0
    %292 = vmatmul.mubr.bf16.gmra.mxu0 %v257
    %v293 = vpop.f32.mrf.mxu0
    %v294 = vadd.f32 %v242, %v293
    %v295 = vpop.f32.mrf.mxu0
    %v296 = vpop.f32.mrf.mxu0
    %v297 = vadd.f32 %v242, %v296
    %v298 = vpop.f32.mrf.mxu0
    %299 = vdwg.mxu0
    %300 = vst [vmem:[#allocation13] sm:$0xff] %v294
    %301 = vst [vmem:[#allocation13 + $0x8] sm:$0xff] %v297
    %v302 = vld [vmem:[#allocation7] sm:$0xf]
    %v303 = vld [vmem:[#allocation7 + $0x4] sm:$0xf]
    %v304 = vld [vmem:[#allocation7 + $0x8] sm:$0xf]
    %v305 = vld [vmem:[#allocation7 + $0xc] sm:$0xf]
    %v306 = vlaneseq
    %v307 = vshrl.u32 %v306, 7
    %v308 = vsub.s32 3, %v307
    %v309 = vrot.slane %v117, %v308
    %v314 = vunpack.c.l.b16 %v302
    %v315 = vunpack.c.l.b16 %v303
    %v316 = vunpack.c.l.b16 %v304
    %v317 = vunpack.c.l.b16 %v305
    %v318 = vpack.c.b16 %v315, %v314
    %v319 = vpack.c.b16 %v317, %v316
    %322 = vmatprep.subr.bf16.mxu0 0
    %323 = vmatpush1.bf16.msra.mxu0 0
    %324 = vmatprep.subr.bf16.mxu0 0
    %325 = vmatpush1.bf16.msra.mxu0 0
    %326 = vmatprep.subr.bf16.mxu0 0
    %327 = vmatpush1.bf16.msra.mxu0 0
    %328 = vmatprep.subr.bf16.mxu0 0
    %329 = vmatpush1.bf16.msra.mxu0 0
    %330 = vmatprep.subr.bf16.mxu0 0
    %331 = vmatpush1.bf16.msra.mxu0 0
    %332 = vmatprep.subr.bf16.mxu0 0
    %333 = vmatpush1.bf16.msra.mxu0 0
    %334 = vmatprep.subr.bf16.mxu0 0
    %335 = vmatpush1.bf16.msra.mxu0 %v319
    %336 = vmatprep.subr.bf16.mxu0 0
    %337 = vmatpush1.bf16.msra.mxu0 %v318
    %338 = vmatprep.subr.bf16.mxu0 0
    %339 = vmatpush2.bf16.msra.mxu0 0
    %340 = vmatprep.subr.bf16.mxu0 0
    %341 = vmatpush2.bf16.msra.mxu0 0
    %342 = vmatprep.subr.bf16.mxu0 0
    %343 = vmatpush2.bf16.msra.mxu0 0
    %344 = vmatprep.subr.bf16.mxu0 0
    %345 = vmatpush2.bf16.msra.mxu0 0
    %346 = vmatprep.subr.bf16.mxu0 0
    %347 = vmatpush2.bf16.msra.mxu0 0
    %348 = vmatprep.subr.bf16.mxu0 0
    %349 = vmatpush2.bf16.msra.mxu0 0
    %350 = vmatprep.subr.bf16.mxu0 0
    %351 = vmatpush2.bf16.msra.mxu0 0
    %352 = vmatprep.subr.bf16.mxu0 0
    %353 = vmatpush2.bf16.msra.mxu0 0
    %354 = vmatprep.mubr.bf16.mxu0 0
    %355 = vmatmul.mubr.bf16.gmra.mxu0 %v140
    %v356 = vpop.f32.mrf.mxu0
    %v357 = vadd.f32 %v309, %v356
    %v358 = vpop.f32.mrf.mxu0
    %v359 = vpop.f32.mrf.mxu0
    %v360 = vadd.f32 %v309, %v359
    %v361 = vpop.f32.mrf.mxu0
    %362 = vdwg.mxu0
    %v363 = vmul.f32 %v357, 0.5
    %v364 = vmul.f32 %v360, 0.5
    %v365 = vmul.f32 %v357, 0.70710677
    %v366 = vmul.f32 %v360, 0.70710677
    %v367 = verf.f32.pop %v365
    %v368 = verf.f32.pop %v366
    %v369 = vadd.f32 %v367, 1.0
    %v370 = vadd.f32 %v368, 1.0
    %v371 = vmul.f32 %v363, %v369
    %v372 = vmul.f32 %v364, %v370
    %v373 = vsel %vm138, %v371, 0.0
    %374 = vadd.xlane.f32.xlu0 %v373
    %v375 = vpop.xlane.xlu0 %374
    %v376 = vsel %vm138, %v372, 0.0
    %377 = vadd.xlane.f32.xlu0 %v376
    %v378 = vpop.xlane.xlu0 %377
    %v379 = vmul.f32 %v375, %v199
    %v380 = vmul.f32 %v378, %v199
    %v381 = vsub.f32 %v371, %v379
    %v382 = vsub.f32 %v372, %v380
    %v383 = vmul.f32 %v381, %v381
    %v384 = vmul.f32 %v382, %v382
    %v385 = vsel %vm138, %v383, 0.0
    %386 = vadd.xlane.f32.xlu0 %v385
    %v387 = vpop.xlane.xlu0 %386
    %v388 = vsel %vm138, %v384, 0.0
    %389 = vadd.xlane.f32.xlu0 %v388
    %v390 = vpop.xlane.xlu0 %389
    %v391 = vmul.f32 %v387, %v199
    %v392 = vmul.f32 %v390, %v199
    %v393 = vadd.f32 %v391, 1e-12
    %v394 = vadd.f32 %v392, 1e-12
    %v395 = vrsqrt.pop %v393
    %v396 = vrsqrt.pop %v394
    %v397 = vmul.f32 %v381, %v395
    %v398 = vmul.f32 %v382, %v396
    %v399 = vlaneseq
    %v400 = vshrl.u32 %v399, 7
    %v401 = vsub.s32 4, %v400
    %v402 = vrot.slane %v117, %v401
    %v403 = vmul.f32 %v397, %v402
    %v404 = vmul.f32 %v398, %v402
    %v405 = vlaneseq
    %v406 = vshrl.u32 %v405, 7
    %v407 = vsub.s32 5, %v406
    %v408 = vrot.slane %v117, %v407
    %v409 = vadd.f32 %v403, %v408
    %v410 = vadd.f32 %v404, %v408
    %v411 = vpack.c.bf16 %v410, %v409
    %v412 = vld [vmem:[#allocation11] sm:$0xf]
    %v413 = vld [vmem:[#allocation11 + $0x4] sm:$0xf]
    %v414 = vld [vmem:[#allocation11 + $0x8] sm:$0xf]
    %v415 = vld [vmem:[#allocation11 + $0xc] sm:$0xf]
    %v416 = vld [vmem:[%s7] sm:$0x1]
    %v418 = vlaneseq
    %v419 = vshrl.u32 %v418, 7
    %v420 = vsub.s32 0, %v419
    %v421 = vrot.slane %v416, %v420
    %v427 = vunpack.c.l.b16 %v412
    %v428 = vunpack.c.l.b16 %v413
    %v429 = vunpack.c.l.b16 %v414
    %v430 = vunpack.c.l.b16 %v415
    %v431 = vpack.c.b16 %v428, %v427
    %v432 = vpack.c.b16 %v430, %v429
    %v436 = vsel %vm138, %v411, 0
    %438 = vmatprep.subr.bf16.mxu0 0
    %439 = vmatpush1.bf16.msra.mxu0 0
    %440 = vmatprep.subr.bf16.mxu0 0
    %441 = vmatpush1.bf16.msra.mxu0 0
    %442 = vmatprep.subr.bf16.mxu0 0
    %443 = vmatpush1.bf16.msra.mxu0 0
    %444 = vmatprep.subr.bf16.mxu0 0
    %445 = vmatpush1.bf16.msra.mxu0 0
    %446 = vmatprep.subr.bf16.mxu0 0
    %447 = vmatpush1.bf16.msra.mxu0 0
    %448 = vmatprep.subr.bf16.mxu0 0
    %449 = vmatpush1.bf16.msra.mxu0 0
    %450 = vmatprep.subr.bf16.mxu0 0
    %451 = vmatpush1.bf16.msra.mxu0 %v432
    %452 = vmatprep.subr.bf16.mxu0 0
    %453 = vmatpush1.bf16.msra.mxu0 %v431
    %454 = vmatprep.subr.bf16.mxu0 0
    %455 = vmatpush2.bf16.msra.mxu0 0
    %456 = vmatprep.subr.bf16.mxu0 0
    %457 = vmatpush2.bf16.msra.mxu0 0
    %458 = vmatprep.subr.bf16.mxu0 0
    %459 = vmatpush2.bf16.msra.mxu0 0
    %460 = vmatprep.subr.bf16.mxu0 0
    %461 = vmatpush2.bf16.msra.mxu0 0
    %462 = vmatprep.subr.bf16.mxu0 0
    %463 = vmatpush2.bf16.msra.mxu0 0
    %464 = vmatprep.subr.bf16.mxu0 0
    %465 = vmatpush2.bf16.msra.mxu0 0
    %466 = vmatprep.subr.bf16.mxu0 0
    %467 = vmatpush2.bf16.msra.mxu0 0
    %468 = vmatprep.subr.bf16.mxu0 0
    %469 = vmatpush2.bf16.msra.mxu0 0
    %470 = vmatprep.mubr.bf16.mxu0 0
    %471 = vmatmul.mubr.bf16.gmra.mxu0 %v436
    %v472 = vpop.f32.mrf.mxu0
    %v473 = vadd.f32 %v421, %v472
    %v474 = vpop.f32.mrf.mxu0
    %v475 = vpop.f32.mrf.mxu0
    %v476 = vadd.f32 %v421, %v475
    %v477 = vpop.f32.mrf.mxu0
    %478 = vdwg.mxu0
    %479 = vst [vmem:[#allocation14] sm:$0xff] %v473
    %480 = vst [vmem:[#allocation14 + $0x8] sm:$0xff] %v476
    // Predicated region
    $region58: #{tpu_custom_call.1} parent=1 // pred_check
      _
    $region59: #{tpu_custom_call.1} parent=1 // pred_check_branch
      %482 = sbr.rel (0) target = $region61
    $region60: #{tpu_custom_call.1} parent=1 // pred_region
      %s484 = ssub.s32 256, 256
      %485 = vsyncadd [#allocation4], %s484
      %s486 = sshll.u32 [#allocation13], 4
      %s487 = int_to_ptr.vmem [resolvable:$true] %s486
      %492 = dma.vmem_to_hbm [thread:$0]  %s487, 256, %s8, [#allocation4], 128, 128, 8
    $region61: #{tpu_custom_call.1} parent=1 // pred_fallthru
      _
    // Predicated region
    $region62: #{tpu_custom_call.1} parent=1 // pred_check
      _
    $region63: #{tpu_custom_call.1} parent=1 // pred_check_branch
      %494 = sbr.rel (0) target = $region65
    $region64: #{tpu_custom_call.1} parent=1 // pred_region
      %s496 = ssub.s32 256, 256
      %497 = vsyncadd [#allocation15], %s496
      %s498 = sshll.u32 [#allocation14], 4
      %s499 = int_to_ptr.vmem [resolvable:$true] %s498
      %504 = dma.vmem_to_hbm [thread:$0]  %s499, 256, %s9, [#allocation15], 128, 128, 8
    $region65: #{tpu_custom_call.1} parent=1 // pred_fallthru
      _
    // Predicated region
    $region66: #{tpu_custom_call.1} parent=1 // pred_check
      _
    $region67: #{tpu_custom_call.1} parent=1 // pred_check_branch
      %506 = sbr.rel (0) target = $region69
    $region68: #{tpu_custom_call.1} parent=1 // pred_region
      %507 = dma.done [#allocation4], 256
    $region69: #{tpu_custom_call.1} parent=1 // pred_fallthru
      _
    // Predicated region
    $region70: #{tpu_custom_call.1} parent=1 // pred_check
      _
    $region71: #{tpu_custom_call.1} parent=1 // pred_check_branch
      %509 = sbr.rel (0) target = $region73
    $region72: #{tpu_custom_call.1} parent=1 // pred_region
      %510 = dma.done [#allocation15], 256
    $region73: #{tpu_custom_call.1} parent=1 // pred_fallthru
      _
    %511 = vsyncpa [#allocation3], 1
    %512 = vsyncpa [#allocation6], 1
    %513 = vsyncpa [#allocation9], 1
    %514 = vsyncpa [#allocation12], 1
    %515 = vsyncpa [#allocation4], 1
    %516 = vsyncpa [#allocation15], 1

</llo_original>
